<compile_context>
chip_gen: v5e
topology: v5e:2x2
jax: 0.10.0
libtpu: 0.0.40
codegen_flags: <defaults>
</compile_context>

<pallas_src>
import functools

import jax
import jax.numpy as jnp
import numpy as np
from jax import lax
from jax.experimental import pallas as pl
from jax.experimental.pallas import tpu as pltpu

_EPS = 1e-5  # nn.BatchNorm1d default eps


def _bn_train(h, g, b, n):
    """Training-mode BN over axis 0 of h:(N, C'); two-pass biased batch stats."""
    inv_n = 1.0 / n
    mean = jnp.sum(h, axis=0, keepdims=True) * inv_n       # (1, C')
    c = h - mean
    var = jnp.sum(c * c, axis=0, keepdims=True) * inv_n    # biased variance
    return c * (lax.rsqrt(var + _EPS) * g) + b


def resnet_block_kernel(xcol1_ref, w12_ref, w2_ref, w3_ref, prm_ref,
                        o_ref, sc_ref, pad_ref, col_ref):
    B, L, C = o_ref.shape          # C == out_channels
    BL = B * L
    n = float(BL)

    # BN parameter slab rows: 0 = [g1|gs], 1 = [b1|bs], 2 = [g2|b2], 3 = [g3|b3]
    g12 = prm_ref[0:1, :]
    b12 = prm_ref[1:2, :]
    g2 = prm_ref[2:3, 0:C]
    b2 = prm_ref[2:3, C:2 * C]
    g3 = prm_ref[3:4, 0:C]
    b3 = prm_ref[3:4, C:2 * C]

    # ---- conv1 (k=15) + shortcut (1x1) fused: one lane-dense (N=2C) matmul --
    # RHS columns [0:C] = conv1 weights, [C:2C] = shortcut weights (tap-7 rows).
    # The shortcut bias is dropped: a constant added before a training-mode BN
    # is exactly cancelled by the batch-mean subtraction.
    h12 = jnp.dot(xcol1_ref[...], w12_ref[...],
                  preferred_element_type=jnp.float32)
    h12 = _bn_train(h12, g12, b12, n)        # bn1 | bn_shortcut, one stats pass
    sc_ref[...] = h12[:, C:2 * C]            # BN'd shortcut, consumed at end
    h1 = jnp.maximum(h12[:, :C], 0.0)        # relu1(bn1(conv1))

    # ---- zero the 8-row halos once (full-tile stores).  The interior is
    # always overwritten, and conv3's pad=1 halo (rows 7 and L+8) lies inside
    # conv2's pad=4 halo, so one zeroing serves both convolutions. ------------
    pad_ref[:, 0:8, :] = jnp.zeros((B, 8, C), jnp.float32)
    pad_ref[:, L + 8:L + 16, :] = jnp.zeros((B, 8, C), jnp.float32)

    # ---- conv2 (k=9, pad=4): im2col slab + ONE MXU matmul, K = 9C -----------
    pad_ref[:, 8:8 + L, :] = h1.reshape(B, L, C)       # 8-aligned full store
    for k in range(9):                                 # one shifted read / tap
        col_ref[:, k * C:(k + 1) * C] = (
            pad_ref[:, 4 + k:4 + k + L, :].reshape(BL, C).astype(col_ref.dtype))
    h2 = jnp.dot(col_ref[...], w2_ref[...], preferred_element_type=jnp.float32)
    h2 = jnp.maximum(_bn_train(h2, g2, b2, n), 0.0)    # relu2(bn2(conv2))

    # ---- conv3 (k=3, pad=1): reuse pad_ref interior and col_ref bands [0:3C]
    pad_ref[:, 8:8 + L, :] = h2.reshape(B, L, C)
    for k in range(3):
        col_ref[:, k * C:(k + 1) * C] = (
            pad_ref[:, 7 + k:7 + k + L, :].reshape(BL, C).astype(col_ref.dtype))
    h3 = jnp.dot(col_ref[:, 0:3 * C], w3_ref[...],
                 preferred_element_type=jnp.float32)
    h3 = _bn_train(h3, g3, b3, n)                      # bn3(conv3)

    # ---- residual add + final ReLU ------------------------------------------
    o_ref[...] = jnp.maximum(h3 + sc_ref[...], 0.0).reshape(B, L, C)


def init_params(key, cin, cout):
    """Deterministic synthetic parameters (shapes per ResNetBlock.__init__)."""
    k = jax.random.split(key, 5)

    def wnorm(kk, K, ci, co):  # stored as (K, Cin, Cout)
        return jax.random.normal(kk, (K, ci, co), jnp.float32) / np.sqrt(K * ci)

    ones = jnp.ones((1, cout), jnp.float32)
    zeros = jnp.zeros((1, cout), jnp.float32)
    return dict(
        w1=wnorm(k[0], 15, cin, cout),
        w2=wnorm(k[1], 9, cout, cout),
        w3=wnorm(k[2], 3, cout, cout),
        ws=wnorm(k[3], 1, cin, cout),
        bias_s=0.1 * jax.random.normal(k[4], (1, cout), jnp.float32),
        g1=ones, b1=zeros, g2=ones, b2=zeros, g3=ones, b3=zeros,
        gs=ones, bs=zeros,
    )


def resnet_block_forward(x_ncl, p):
    """x_ncl: (B, Cin, L) PyTorch NCL layout.  Returns (B, Cout, L)."""
    B, Cin, L = x_ncl.shape
    K1 = p['w1'].shape[0]                      # 15
    Cout = p['w1'].shape[2]

    # --- pure-JAX glue: layout transposes, conv1 im2col slab, weight slabs ---
    # TODO(synk): at production sizes do the conv1 im2col in-kernel (per-tap,
    # like conv2/conv3) so x is read from HBM once instead of 15x.
    x_blc = jnp.transpose(x_ncl, (0, 2, 1)).astype(jnp.float32)
    xp1 = jnp.pad(x_blc, ((0, 0), (K1 // 2, K1 // 2), (0, 0)))   # (B, L+14, Cin)
    xcol1 = jnp.concatenate([xp1[:, k:k + L, :] for k in range(K1)], axis=-1)
    xcol1 = xcol1.reshape(B * L, K1 * Cin)                       # (B*L, 15*Cin)

    kc = K1 * Cin                              # 60
    kc_pad = -(-kc // 8) * 8                   # 64: sublane-tile-aligned K
    w1s = p['w1'].reshape(kc, Cout)                              # conv1 slab
    wsc = jnp.zeros((kc, Cout), jnp.float32)
    wsc = wsc.at[(K1 // 2) * Cin:(K1 // 2 + 1) * Cin, :].set(p['ws'][0])
    w12 = jnp.concatenate([w1s, wsc], axis=1)                    # (60, 2*Cout)
    # bf16 matmul operands (f32 accumulation in-kernel); pad K 60 -> 64.
    xcol1 = jnp.pad(xcol1, ((0, 0), (0, kc_pad - kc))).astype(jnp.bfloat16)
    w12 = jnp.pad(w12, ((0, kc_pad - kc), (0, 0))).astype(jnp.bfloat16)
    w2s = p['w2'].reshape(9 * Cout, Cout).astype(jnp.bfloat16)   # (9C, C)
    w3s = p['w3'].reshape(3 * Cout, Cout).astype(jnp.bfloat16)   # (3C, C)

    # One (8, 2C) f32 slab for all BN affine params (single DMA).
    prm = jnp.zeros((8, 2 * Cout), jnp.float32)
    prm = prm.at[0, :Cout].set(p['g1'][0]).at[0, Cout:].set(p['gs'][0])
    prm = prm.at[1, :Cout].set(p['b1'][0]).at[1, Cout:].set(p['bs'][0])
    prm = prm.at[2, :Cout].set(p['g2'][0]).at[2, Cout:].set(p['b2'][0])
    prm = prm.at[3, :Cout].set(p['g3'][0]).at[3, Cout:].set(p['b3'][0])

    inputs = (xcol1, w12, w2s, w3s, prm)

    # --- explicit VMEM budget: IO + scratch (nothing is double-buffered in a
    # gridless call); 2x headroom for compiler temporaries; clamp to
    # [16 MiB scoped default, 64 MiB v7x physical]. ----------------------------
    f32, bf16 = 4, 2
    io_bytes = sum(int(np.prod(a.shape)) * a.dtype.itemsize for a in inputs)
    io_bytes += B * L * Cout * f32                               # output
    scratch_bytes = (B * L * Cout * f32                          # sc_ref
                     + B * (L + 16) * Cout * f32                 # pad_ref
                     + B * L * 9 * Cout * bf16)                  # col_ref
    est = 2 * (io_bytes + scratch_bytes)
    vmem_limit = int(min(max(est, 16 * 2 ** 20), 64 * 2 ** 20))

    vmem = functools.partial(pl.BlockSpec, memory_space=pltpu.MemorySpace.VMEM)
    # NOTE: gridless single-invocation design (everything VMEM-resident) is
    # right for these small shapes.  At production B*L this should become a
    # gridded kernel (grid over B*L tiles with "parallel" semantics so both
    # v7x TensorCores are used) with a two-pass BN (stats pass + normalize
    # pass), and Cout=64 should be packed 2x on lanes for lane-dense stores.
    out_blc = pl.pallas_call(
        resnet_block_kernel,
        out_shape=jax.ShapeDtypeStruct((B, L, Cout), jnp.float32),
        in_specs=[vmem() for _ in range(len(inputs))],
        out_specs=vmem(),
        scratch_shapes=[
            pltpu.VMEM((B * L, Cout), jnp.float32),       # BN'd shortcut branch
            pltpu.VMEM((B, L + 16, Cout), jnp.float32),   # 8-aligned padded buf
            pltpu.VMEM((B * L, 9 * Cout), jnp.bfloat16),  # shared im2col slab
        ],
        compiler_params=pltpu.CompilerParams(vmem_limit_bytes=vmem_limit),
    )(*inputs)
    return jnp.transpose(out_blc, (0, 2, 1))


def reference_forward(x_ncl, p):
    """Pure-JAX reference of the same forward pass (NCL layout)."""
    def conv(x, w_kio, pad):
        w = jnp.transpose(w_kio, (2, 1, 0))  # (O, I, K)
        return jax.lax.conv_general_dilated(
            x, w, window_strides=(1,), padding=[(pad, pad)],
            dimension_numbers=('NCH', 'OIH', 'NCH'))

    def bn(h, g, b):
        m = jnp.mean(h, axis=(0, 2), keepdims=True)
        v = jnp.mean((h - m) ** 2, axis=(0, 2), keepdims=True)
        return (h - m) / jnp.sqrt(v + _EPS) * g[:, :, None] + b[:, :, None]

    sc = bn(conv(x_ncl, p['ws'], 0) + p['bias_s'][:, :, None], p['gs'], p['bs'])
    h = jax.nn.relu(bn(conv(x_ncl, p['w1'], 7), p['g1'], p['b1']))
    h = jax.nn.relu(bn(conv(h, p['w2'], 4), p['g2'], p['b2']))
    h = bn(conv(h, p['w3'], 1), p['g3'], p['b3'])
    return jax.nn.relu(h + sc)


if __name__ == "__main__":
    key = jax.random.PRNGKey(0)
    kx, kp = jax.random.split(key)
    B, Cin, L, Cout = 2, 4, 16, 64
    x = jax.random.normal(kx, (B, Cin, L), jnp.float32)
    params = init_params(kp, Cin, Cout)

    out = jax.block_until_ready(resnet_block_forward(x, params))
    ref = jax.block_until_ready(reference_forward(x, params))
    assert out.shape == (B, Cout, L), out.shape
    err = float(jnp.max(jnp.abs(out - ref)))
    # bf16 matmul operands (f32 accumulation) vs an all-f32 reference: post-BN
    # activations are unit-scale, so expected max abs error is ~1e-2; 5e-2 is
    # a comfortable but still meaningful bound.
    if not np.isfinite(err) or err > 5e-2:
        raise AssertionError(f"mismatch vs reference: max abs err = {err}")
    print("KERNEL_OK")
</pallas_src>

<mosaic_0001>
module attributes {stable_mosaic.version = 11 : i64} {
  func.func @resnet_block_kernel(%arg0: memref<32x64xbf16, #tpu.memory_space<vmem>>, %arg1: memref<64x128xbf16, #tpu.memory_space<vmem>>, %arg2: memref<576x64xbf16, #tpu.memory_space<vmem>>, %arg3: memref<192x64xbf16, #tpu.memory_space<vmem>>, %arg4: memref<8x128xf32, #tpu.memory_space<vmem>>, %arg5: memref<2x16x64xf32, #tpu.memory_space<vmem>>, %arg6: memref<32x64xf32, #tpu.memory_space<vmem>>, %arg7: memref<2x32x64xf32, #tpu.memory_space<vmem>>, %arg8: memref<32x576xbf16, #tpu.memory_space<vmem>>) attributes {dimension_semantics = [], scalar_prefetch = 0 : i64, scratch_operands = 3 : i64, tpu.core_type = #tpu.core_type<tc>} {
    %c0 = arith.constant 0 : index
    %c0_0 = arith.constant 0 : index
    %0 = vector.load %arg4[%c0, %c0_0] : memref<8x128xf32, #tpu.memory_space<vmem>>, vector<1x128xf32>
    %c1 = arith.constant 1 : index
    %c0_1 = arith.constant 0 : index
    %1 = vector.load %arg4[%c1, %c0_1] : memref<8x128xf32, #tpu.memory_space<vmem>>, vector<1x128xf32>
    %c2 = arith.constant 2 : index
    %c0_2 = arith.constant 0 : index
    %2 = vector.load %arg4[%c2, %c0_2] : memref<8x128xf32, #tpu.memory_space<vmem>>, vector<1x64xf32>
    %c2_3 = arith.constant 2 : index
    %c64 = arith.constant 64 : index
    %3 = vector.load %arg4[%c2_3, %c64] : memref<8x128xf32, #tpu.memory_space<vmem>>, vector<1x64xf32>
    %c3 = arith.constant 3 : index
    %c0_4 = arith.constant 0 : index
    %4 = vector.load %arg4[%c3, %c0_4] : memref<8x128xf32, #tpu.memory_space<vmem>>, vector<1x64xf32>
    %c3_5 = arith.constant 3 : index
    %c64_6 = arith.constant 64 : index
    %5 = vector.load %arg4[%c3_5, %c64_6] : memref<8x128xf32, #tpu.memory_space<vmem>>, vector<1x64xf32>
    %c0_7 = arith.constant 0 : index
    %c0_8 = arith.constant 0 : index
    %6 = vector.load %arg0[%c0_7, %c0_8] : memref<32x64xbf16, #tpu.memory_space<vmem>>, vector<32x64xbf16>
    %c0_9 = arith.constant 0 : index
    %c0_10 = arith.constant 0 : index
    %7 = vector.load %arg1[%c0_9, %c0_10] : memref<64x128xbf16, #tpu.memory_space<vmem>>, vector<64x128xbf16>
    %cst = arith.constant dense<0.000000e+00> : vector<32x128xf32>
    %8 = tpu.matmul %6, %7, %cst {dimension_numbers = #tpu.dot_dimension_numbers<[1], [0], [0], [1], [0, 0, 1, 1], [], []>} : vector<32x64xbf16>, vector<64x128xbf16>, vector<32x128xf32> -> vector<32x128xf32>
    %cst_11 = arith.constant dense<0.000000e+00> : vector<128xf32>
    %9 = vector.multi_reduction <add>, %8, %cst_11 [0] : vector<32x128xf32> to vector<128xf32>
    %10 = vector.shape_cast %9 : vector<128xf32> to vector<1x128xf32>
    %cst_12 = arith.constant 3.125000e-02 : f32
    %11 = vector.broadcast %cst_12 : f32 to vector<1x128xf32>
    %12 = arith.mulf %10, %11 : vector<1x128xf32>
    %13 = vector.broadcast %12 : vector<1x128xf32> to vector<32x128xf32>
    %14 = arith.subf %8, %13 : vector<32x128xf32>
    %15 = arith.mulf %14, %14 : vector<32x128xf32>
    %cst_13 = arith.constant dense<0.000000e+00> : vector<128xf32>
    %16 = vector.multi_reduction <add>, %15, %cst_13 [0] : vector<32x128xf32> to vector<128xf32>
    %17 = vector.shape_cast %16 : vector<128xf32> to vector<1x128xf32>
    %cst_14 = arith.constant 3.125000e-02 : f32
    %18 = vector.broadcast %cst_14 : f32 to vector<1x128xf32>
    %19 = arith.mulf %17, %18 : vector<1x128xf32>
    %cst_15 = arith.constant 9.99999974E-6 : f32
    %20 = vector.broadcast %cst_15 : f32 to vector<1x128xf32>
    %21 = arith.addf %19, %20 : vector<1x128xf32>
    %22 = math.rsqrt %21 : vector<1x128xf32>
    %23 = arith.mulf %22, %0 : vector<1x128xf32>
    %24 = vector.broadcast %23 : vector<1x128xf32> to vector<32x128xf32>
    %25 = arith.mulf %14, %24 : vector<32x128xf32>
    %26 = vector.broadcast %1 : vector<1x128xf32> to vector<32x128xf32>
    %27 = arith.addf %25, %26 : vector<32x128xf32>
    %28 = vector.extract_strided_slice %27 {offsets = [0, 64], sizes = [32, 64], strides = [1, 1]} : vector<32x128xf32> to vector<32x64xf32>
    %c0_16 = arith.constant 0 : index
    %c0_17 = arith.constant 0 : index
    %29 = vector.load %arg6[%c0_16, %c0_17] : memref<32x64xf32, #tpu.memory_space<vmem>>, vector<32x64xf32>
    tpu.vector_store %arg6[%c0_16, %c0_17], %28 {strides = array<i32>} : memref<32x64xf32, #tpu.memory_space<vmem>>, vector<32x64xf32>,
    %30 = vector.extract_strided_slice %27 {offsets = [0, 0], sizes = [32, 64], strides = [1, 1]} : vector<32x128xf32> to vector<32x64xf32>
    %cst_18 = arith.constant 0.000000e+00 : f32
    %31 = vector.broadcast %cst_18 : f32 to vector<32x64xf32>
    %32 = arith.maximumf %30, %31 : vector<32x64xf32>
    %cst_19 = arith.constant 0.000000e+00 : f32
    %33 = vector.broadcast %cst_19 : f32 to vector<2x8x64xf32>
    %c0_20 = arith.constant 0 : index
    %c0_21 = arith.constant 0 : index
    %c0_22 = arith.constant 0 : index
    %34 = vector.load %arg7[%c0_20, %c0_21, %c0_22] : memref<2x32x64xf32, #tpu.memory_space<vmem>>, vector<2x8x64xf32>
    tpu.vector_store %arg7[%c0_20, %c0_21, %c0_22], %33 {strides = array<i32>} : memref<2x32x64xf32, #tpu.memory_space<vmem>>, vector<2x8x64xf32>,
    %cst_23 = arith.constant 0.000000e+00 : f32
    %35 = vector.broadcast %cst_23 : f32 to vector<2x8x64xf32>
    %c0_24 = arith.constant 0 : index
    %c24 = arith.constant 24 : index
    %c0_25 = arith.constant 0 : index
    %36 = vector.load %arg7[%c0_24, %c24, %c0_25] : memref<2x32x64xf32, #tpu.memory_space<vmem>>, vector<2x8x64xf32>
    tpu.vector_store %arg7[%c0_24, %c24, %c0_25], %35 {strides = array<i32>} : memref<2x32x64xf32, #tpu.memory_space<vmem>>, vector<2x8x64xf32>,
    %37 = vector.shape_cast %32 : vector<32x64xf32> to vector<2x16x64xf32>
    %c0_26 = arith.constant 0 : index
    %c8 = arith.constant 8 : index
    %c0_27 = arith.constant 0 : index
    %38 = vector.load %arg7[%c0_26, %c8, %c0_27] : memref<2x32x64xf32, #tpu.memory_space<vmem>>, vector<2x16x64xf32>
    tpu.vector_store %arg7[%c0_26, %c8, %c0_27], %37 {strides = array<i32>} : memref<2x32x64xf32, #tpu.memory_space<vmem>>, vector<2x16x64xf32>,
    %c0_28 = arith.constant 0 : index
    %c4 = arith.constant 4 : index
    %c0_29 = arith.constant 0 : index
    %39 = vector.load %arg7[%c0_28, %c4, %c0_29] : memref<2x32x64xf32, #tpu.memory_space<vmem>>, vector<2x16x64xf32>
    %40 = vector.shape_cast %39 : vector<2x16x64xf32> to vector<32x64xf32>
    %41 = arith.truncf %40 : vector<32x64xf32> to vector<32x64xbf16>
    %c0_30 = arith.constant 0 : index
    %c0_31 = arith.constant 0 : index
    %42 = vector.load %arg8[%c0_30, %c0_31] : memref<32x576xbf16, #tpu.memory_space<vmem>>, vector<32x64xbf16>
    tpu.vector_store %arg8[%c0_30, %c0_31], %41 {strides = array<i32>} : memref<32x576xbf16, #tpu.memory_space<vmem>>, vector<32x64xbf16>,
    %c0_32 = arith.constant 0 : index
    %c5 = arith.constant 5 : index
    %c0_33 = arith.constant 0 : index
    %43 = vector.load %arg7[%c0_32, %c5, %c0_33] : memref<2x32x64xf32, #tpu.memory_space<vmem>>, vector<2x16x64xf32>
    %44 = vector.shape_cast %43 : vector<2x16x64xf32> to vector<32x64xf32>
    %45 = arith.truncf %44 : vector<32x64xf32> to vector<32x64xbf16>
    %c0_34 = arith.constant 0 : index
    %c64_35 = arith.constant 64 : index
    %46 = vector.load %arg8[%c0_34, %c64_35] : memref<32x576xbf16, #tpu.memory_space<vmem>>, vector<32x64xbf16>
    tpu.vector_store %arg8[%c0_34, %c64_35], %45 {strides = array<i32>} : memref<32x576xbf16, #tpu.memory_space<vmem>>, vector<32x64xbf16>,
    %c0_36 = arith.constant 0 : index
    %c6 = arith.constant 6 : index
    %c0_37 = arith.constant 0 : index
    %47 = vector.load %arg7[%c0_36, %c6, %c0_37] : memref<2x32x64xf32, #tpu.memory_space<vmem>>, vector<2x16x64xf32>
    %48 = vector.shape_cast %47 : vector<2x16x64xf32> to vector<32x64xf32>
    %49 = arith.truncf %48 : vector<32x64xf32> to vector<32x64xbf16>
    %c0_38 = arith.constant 0 : index
    %c128 = arith.constant 128 : index
    %50 = vector.load %arg8[%c0_38, %c128] : memref<32x576xbf16, #tpu.memory_space<vmem>>, vector<32x64xbf16>
    tpu.vector_store %arg8[%c0_38, %c128], %49 {strides = array<i32>} : memref<32x576xbf16, #tpu.memory_space<vmem>>, vector<32x64xbf16>,
    %c0_39 = arith.constant 0 : index
    %c7 = arith.constant 7 : index
    %c0_40 = arith.constant 0 : index
    %51 = vector.load %arg7[%c0_39, %c7, %c0_40] : memref<2x32x64xf32, #tpu.memory_space<vmem>>, vector<2x16x64xf32>
    %52 = vector.shape_cast %51 : vector<2x16x64xf32> to vector<32x64xf32>
    %53 = arith.truncf %52 : vector<32x64xf32> to vector<32x64xbf16>
    %c0_41 = arith.constant 0 : index
    %c192 = arith.constant 192 : index
    %54 = vector.load %arg8[%c0_41, %c192] : memref<32x576xbf16, #tpu.memory_space<vmem>>, vector<32x64xbf16>
    tpu.vector_store %arg8[%c0_41, %c192], %53 {strides = array<i32>} : memref<32x576xbf16, #tpu.memory_space<vmem>>, vector<32x64xbf16>,
    %c0_42 = arith.constant 0 : index
    %c8_43 = arith.constant 8 : index
    %c0_44 = arith.constant 0 : index
    %55 = vector.load %arg7[%c0_42, %c8_43, %c0_44] : memref<2x32x64xf32, #tpu.memory_space<vmem>>, vector<2x16x64xf32>
    %56 = vector.shape_cast %55 : vector<2x16x64xf32> to vector<32x64xf32>
    %57 = arith.truncf %56 : vector<32x64xf32> to vector<32x64xbf16>
    %c0_45 = arith.constant 0 : index
    %c256 = arith.constant 256 : index
    %58 = vector.load %arg8[%c0_45, %c256] : memref<32x576xbf16, #tpu.memory_space<vmem>>, vector<32x64xbf16>
    tpu.vector_store %arg8[%c0_45, %c256], %57 {strides = array<i32>} : memref<32x576xbf16, #tpu.memory_space<vmem>>, vector<32x64xbf16>,
    %c0_46 = arith.constant 0 : index
    %c9 = arith.constant 9 : index
    %c0_47 = arith.constant 0 : index
    %59 = vector.load %arg7[%c0_46, %c9, %c0_47] : memref<2x32x64xf32, #tpu.memory_space<vmem>>, vector<2x16x64xf32>
    %60 = vector.shape_cast %59 : vector<2x16x64xf32> to vector<32x64xf32>
    %61 = arith.truncf %60 : vector<32x64xf32> to vector<32x64xbf16>
    %c0_48 = arith.constant 0 : index
    %c320 = arith.constant 320 : index
    %62 = vector.load %arg8[%c0_48, %c320] : memref<32x576xbf16, #tpu.memory_space<vmem>>, vector<32x64xbf16>
    tpu.vector_store %arg8[%c0_48, %c320], %61 {strides = array<i32>} : memref<32x576xbf16, #tpu.memory_space<vmem>>, vector<32x64xbf16>,
    %c0_49 = arith.constant 0 : index
    %c10 = arith.constant 10 : index
    %c0_50 = arith.constant 0 : index
    %63 = vector.load %arg7[%c0_49, %c10, %c0_50] : memref<2x32x64xf32, #tpu.memory_space<vmem>>, vector<2x16x64xf32>
    %64 = vector.shape_cast %63 : vector<2x16x64xf32> to vector<32x64xf32>
    %65 = arith.truncf %64 : vector<32x64xf32> to vector<32x64xbf16>
    %c0_51 = arith.constant 0 : index
    %c384 = arith.constant 384 : index
    %66 = vector.load %arg8[%c0_51, %c384] : memref<32x576xbf16, #tpu.memory_space<vmem>>, vector<32x64xbf16>
    tpu.vector_store %arg8[%c0_51, %c384], %65 {strides = array<i32>} : memref<32x576xbf16, #tpu.memory_space<vmem>>, vector<32x64xbf16>,
    %c0_52 = arith.constant 0 : index
    %c11 = arith.constant 11 : index
    %c0_53 = arith.constant 0 : index
    %67 = vector.load %arg7[%c0_52, %c11, %c0_53] : memref<2x32x64xf32, #tpu.memory_space<vmem>>, vector<2x16x64xf32>
    %68 = vector.shape_cast %67 : vector<2x16x64xf32> to vector<32x64xf32>
    %69 = arith.truncf %68 : vector<32x64xf32> to vector<32x64xbf16>
    %c0_54 = arith.constant 0 : index
    %c448 = arith.constant 448 : index
    %70 = vector.load %arg8[%c0_54, %c448] : memref<32x576xbf16, #tpu.memory_space<vmem>>, vector<32x64xbf16>
    tpu.vector_store %arg8[%c0_54, %c448], %69 {strides = array<i32>} : memref<32x576xbf16, #tpu.memory_space<vmem>>, vector<32x64xbf16>,
    %c0_55 = arith.constant 0 : index
    %c12 = arith.constant 12 : index
    %c0_56 = arith.constant 0 : index
    %71 = vector.load %arg7[%c0_55, %c12, %c0_56] : memref<2x32x64xf32, #tpu.memory_space<vmem>>, vector<2x16x64xf32>
    %72 = vector.shape_cast %71 : vector<2x16x64xf32> to vector<32x64xf32>
    %73 = arith.truncf %72 : vector<32x64xf32> to vector<32x64xbf16>
    %c0_57 = arith.constant 0 : index
    %c512 = arith.constant 512 : index
    %74 = vector.load %arg8[%c0_57, %c512] : memref<32x576xbf16, #tpu.memory_space<vmem>>, vector<32x64xbf16>
    tpu.vector_store %arg8[%c0_57, %c512], %73 {strides = array<i32>} : memref<32x576xbf16, #tpu.memory_space<vmem>>, vector<32x64xbf16>,
    %c0_58 = arith.constant 0 : index
    %c0_59 = arith.constant 0 : index
    %75 = vector.load %arg8[%c0_58, %c0_59] : memref<32x576xbf16, #tpu.memory_space<vmem>>, vector<32x576xbf16>
    %c0_60 = arith.constant 0 : index
    %c0_61 = arith.constant 0 : index
    %76 = vector.load %arg2[%c0_60, %c0_61] : memref<576x64xbf16, #tpu.memory_space<vmem>>, vector<576x64xbf16>
    %cst_62 = arith.constant dense<0.000000e+00> : vector<32x64xf32>
    %77 = tpu.matmul %75, %76, %cst_62 {dimension_numbers = #tpu.dot_dimension_numbers<[1], [0], [0], [1], [0, 0, 1, 1], [], []>} : vector<32x576xbf16>, vector<576x64xbf16>, vector<32x64xf32> -> vector<32x64xf32>
    %cst_63 = arith.constant dense<0.000000e+00> : vector<64xf32>
    %78 = vector.multi_reduction <add>, %77, %cst_63 [0] : vector<32x64xf32> to vector<64xf32>
    %79 = vector.shape_cast %78 : vector<64xf32> to vector<1x64xf32>
    %cst_64 = arith.constant 3.125000e-02 : f32
    %80 = vector.broadcast %cst_64 : f32 to vector<1x64xf32>
    %81 = arith.mulf %79, %80 : vector<1x64xf32>
    %82 = vector.broadcast %81 : vector<1x64xf32> to vector<32x64xf32>
    %83 = arith.subf %77, %82 : vector<32x64xf32>
    %84 = arith.mulf %83, %83 : vector<32x64xf32>
    %cst_65 = arith.constant dense<0.000000e+00> : vector<64xf32>
    %85 = vector.multi_reduction <add>, %84, %cst_65 [0] : vector<32x64xf32> to vector<64xf32>
    %86 = vector.shape_cast %85 : vector<64xf32> to vector<1x64xf32>
    %cst_66 = arith.constant 3.125000e-02 : f32
    %87 = vector.broadcast %cst_66 : f32 to vector<1x64xf32>
    %88 = arith.mulf %86, %87 : vector<1x64xf32>
    %cst_67 = arith.constant 9.99999974E-6 : f32
    %89 = vector.broadcast %cst_67 : f32 to vector<1x64xf32>
    %90 = arith.addf %88, %89 : vector<1x64xf32>
    %91 = math.rsqrt %90 : vector<1x64xf32>
    %92 = arith.mulf %91, %2 : vector<1x64xf32>
    %93 = vector.broadcast %92 : vector<1x64xf32> to vector<32x64xf32>
    %94 = arith.mulf %83, %93 : vector<32x64xf32>
    %95 = vector.broadcast %3 : vector<1x64xf32> to vector<32x64xf32>
    %96 = arith.addf %94, %95 : vector<32x64xf32>
    %cst_68 = arith.constant 0.000000e+00 : f32
    %97 = vector.broadcast %cst_68 : f32 to vector<32x64xf32>
    %98 = arith.maximumf %96, %97 : vector<32x64xf32>
    %99 = vector.shape_cast %98 : vector<32x64xf32> to vector<2x16x64xf32>
    %c0_69 = arith.constant 0 : index
    %c8_70 = arith.constant 8 : index
    %c0_71 = arith.constant 0 : index
    %100 = vector.load %arg7[%c0_69, %c8_70, %c0_71] : memref<2x32x64xf32, #tpu.memory_space<vmem>>, vector<2x16x64xf32>
    tpu.vector_store %arg7[%c0_69, %c8_70, %c0_71], %99 {strides = array<i32>} : memref<2x32x64xf32, #tpu.memory_space<vmem>>, vector<2x16x64xf32>,
    %c0_72 = arith.constant 0 : index
    %c7_73 = arith.constant 7 : index
    %c0_74 = arith.constant 0 : index
    %101 = vector.load %arg7[%c0_72, %c7_73, %c0_74] : memref<2x32x64xf32, #tpu.memory_space<vmem>>, vector<2x16x64xf32>
    %102 = vector.shape_cast %101 : vector<2x16x64xf32> to vector<32x64xf32>
    %103 = arith.truncf %102 : vector<32x64xf32> to vector<32x64xbf16>
    %c0_75 = arith.constant 0 : index
    %c0_76 = arith.constant 0 : index
    %104 = vector.load %arg8[%c0_75, %c0_76] : memref<32x576xbf16, #tpu.memory_space<vmem>>, vector<32x64xbf16>
    tpu.vector_store %arg8[%c0_75, %c0_76], %103 {strides = array<i32>} : memref<32x576xbf16, #tpu.memory_space<vmem>>, vector<32x64xbf16>,
    %c0_77 = arith.constant 0 : index
    %c8_78 = arith.constant 8 : index
    %c0_79 = arith.constant 0 : index
    %105 = vector.load %arg7[%c0_77, %c8_78, %c0_79] : memref<2x32x64xf32, #tpu.memory_space<vmem>>, vector<2x16x64xf32>
    %106 = vector.shape_cast %105 : vector<2x16x64xf32> to vector<32x64xf32>
    %107 = arith.truncf %106 : vector<32x64xf32> to vector<32x64xbf16>
    %c0_80 = arith.constant 0 : index
    %c64_81 = arith.constant 64 : index
    %108 = vector.load %arg8[%c0_80, %c64_81] : memref<32x576xbf16, #tpu.memory_space<vmem>>, vector<32x64xbf16>
    tpu.vector_store %arg8[%c0_80, %c64_81], %107 {strides = array<i32>} : memref<32x576xbf16, #tpu.memory_space<vmem>>, vector<32x64xbf16>,
    %c0_82 = arith.constant 0 : index
    %c9_83 = arith.constant 9 : index
    %c0_84 = arith.constant 0 : index
    %109 = vector.load %arg7[%c0_82, %c9_83, %c0_84] : memref<2x32x64xf32, #tpu.memory_space<vmem>>, vector<2x16x64xf32>
    %110 = vector.shape_cast %109 : vector<2x16x64xf32> to vector<32x64xf32>
    %111 = arith.truncf %110 : vector<32x64xf32> to vector<32x64xbf16>
    %c0_85 = arith.constant 0 : index
    %c128_86 = arith.constant 128 : index
    %112 = vector.load %arg8[%c0_85, %c128_86] : memref<32x576xbf16, #tpu.memory_space<vmem>>, vector<32x64xbf16>
    tpu.vector_store %arg8[%c0_85, %c128_86], %111 {strides = array<i32>} : memref<32x576xbf16, #tpu.memory_space<vmem>>, vector<32x64xbf16>,
    %c0_87 = arith.constant 0 : index
    %c0_88 = arith.constant 0 : index
    %113 = vector.load %arg8[%c0_87, %c0_88] : memref<32x576xbf16, #tpu.memory_space<vmem>>, vector<32x192xbf16>
    %c0_89 = arith.constant 0 : index
    %c0_90 = arith.constant 0 : index
    %114 = vector.load %arg3[%c0_89, %c0_90] : memref<192x64xbf16, #tpu.memory_space<vmem>>, vector<192x64xbf16>
    %cst_91 = arith.constant dense<0.000000e+00> : vector<32x64xf32>
    %115 = tpu.matmul %113, %114, %cst_91 {dimension_numbers = #tpu.dot_dimension_numbers<[1], [0], [0], [1], [0, 0, 1, 1], [], []>} : vector<32x192xbf16>, vector<192x64xbf16>, vector<32x64xf32> -> vector<32x64xf32>
    %cst_92 = arith.constant dense<0.000000e+00> : vector<64xf32>
    %116 = vector.multi_reduction <add>, %115, %cst_92 [0] : vector<32x64xf32> to vector<64xf32>
    %117 = vector.shape_cast %116 : vector<64xf32> to vector<1x64xf32>
    %cst_93 = arith.constant 3.125000e-02 : f32
    %118 = vector.broadcast %cst_93 : f32 to vector<1x64xf32>
    %119 = arith.mulf %117, %118 : vector<1x64xf32>
    %120 = vector.broadcast %119 : vector<1x64xf32> to vector<32x64xf32>
    %121 = arith.subf %115, %120 : vector<32x64xf32>
    %122 = arith.mulf %121, %121 : vector<32x64xf32>
    %cst_94 = arith.constant dense<0.000000e+00> : vector<64xf32>
    %123 = vector.multi_reduction <add>, %122, %cst_94 [0] : vector<32x64xf32> to vector<64xf32>
    %124 = vector.shape_cast %123 : vector<64xf32> to vector<1x64xf32>
    %cst_95 = arith.constant 3.125000e-02 : f32
    %125 = vector.broadcast %cst_95 : f32 to vector<1x64xf32>
    %126 = arith.mulf %124, %125 : vector<1x64xf32>
    %cst_96 = arith.constant 9.99999974E-6 : f32
    %127 = vector.broadcast %cst_96 : f32 to vector<1x64xf32>
    %128 = arith.addf %126, %127 : vector<1x64xf32>
    %129 = math.rsqrt %128 : vector<1x64xf32>
    %130 = arith.mulf %129, %4 : vector<1x64xf32>
    %131 = vector.broadcast %130 : vector<1x64xf32> to vector<32x64xf32>
    %132 = arith.mulf %121, %131 : vector<32x64xf32>
    %133 = vector.broadcast %5 : vector<1x64xf32> to vector<32x64xf32>
    %134 = arith.addf %132, %133 : vector<32x64xf32>
    %c0_97 = arith.constant 0 : index
    %c0_98 = arith.constant 0 : index
    %135 = vector.load %arg6[%c0_97, %c0_98] : memref<32x64xf32, #tpu.memory_space<vmem>>, vector<32x64xf32>
    %136 = arith.addf %134, %135 : vector<32x64xf32>
    %cst_99 = arith.constant 0.000000e+00 : f32
    %137 = vector.broadcast %cst_99 : f32 to vector<32x64xf32>
    %138 = arith.maximumf %136, %137 : vector<32x64xf32>
    %139 = vector.shape_cast %138 : vector<32x64xf32> to vector<2x16x64xf32>
    %c0_100 = arith.constant 0 : index
    %c0_101 = arith.constant 0 : index
    %c0_102 = arith.constant 0 : index
    %140 = vector.load %arg5[%c0_100, %c0_101, %c0_102] : memref<2x16x64xf32, #tpu.memory_space<vmem>>, vector<2x16x64xf32>
    tpu.vector_store %arg5[%c0_100, %c0_101, %c0_102], %139 {strides = array<i32>} : memref<2x16x64xf32, #tpu.memory_space<vmem>>, vector<2x16x64xf32>,
    return
  }
}

</mosaic_0001>

<llo_original>
// kernel: tpu_custom_call.1
$region0: #{tpu_custom_call.1}
  #allocation0 [shape = 'u32[]', space=smem, size = 0x4, offset = 0x4, fixed_abs, tag = 'smem constant byte address 0x4 - core index']
  #allocation1 [shape = 'u32[72,128]{1,0:T(1,128)}', space=vmem, size = 0x9000, scoped, tag = 'internal scratch']
  #allocation2 [shape = 'f32[32,64]{1,0:T(8,128)}', space=vmem, size = 0x4000, scoped, tag = 'scratch operand']
  #allocation3 [shape = 'f32[2,32,64]{2,1,0:T(8,128)}', space=vmem, size = 0x8000, scoped, tag = 'scratch operand']
  #allocation4 [shape = 'bf16[32,576]{1,0:T(8,128)(2,1)}', space=vmem, size = 0xa000, scoped, tag = 'scratch operand']
  %s0 = inlined_call_operand.vmem [shape: bf16[32,64], index: 0, kind: input, shape index: {}]
  %s1 = inlined_call_operand.vmem [shape: bf16[64,128], index: 1, kind: input, shape index: {}]
  %s2 = inlined_call_operand.vmem [shape: bf16[576,64], index: 2, kind: input, shape index: {}]
  %s3 = inlined_call_operand.vmem [shape: bf16[192,64], index: 3, kind: input, shape index: {}]
  %s4 = inlined_call_operand.vmem [shape: f32[8,128], index: 4, kind: input, shape index: {}]
  %s5 = inlined_call_operand.hbm [shape: f32[2,16,64], index: 5, kind: output, shape index: {}]
  %s6 = sld [smem:[#allocation0]]
  $region30: #{tpu_custom_call.1} parent=0
    _
  %s8 = ssub.s32 1, %s6
  %s9 = scalar_select 0, %s8, %s6
  $region1: #{tpu_custom_call.1} parent=0
    #allocation5 [shape = 'u8[16384]{0}', space=vmem, size = 0x4000, scoped, tag = 'output window, operand 0, single buffered']
    #allocation6 [shape = 's32[1]{0}', space=sflag, size = 0x4, scoped, tag = 'scoped memory for tpu_custom_call.1']
    %10 = vsyncpa [#allocation6], 0
    // Predicated region
    $region2: #{tpu_custom_call.1} parent=1 // pred_check
      _
    $region3: #{tpu_custom_call.1} parent=1 // pred_check_branch
      %12 = sbr.rel (0) target = $region5
    $region4: #{tpu_custom_call.1} parent=1 // pred_region
      _
    $region5: #{tpu_custom_call.1} parent=1 // pred_fallthru
      _
    // Predicated region
    $region6: #{tpu_custom_call.1} parent=1 // pred_check
      _
    $region7: #{tpu_custom_call.1} parent=1 // pred_check_branch
      %14 = sbr.rel (0) target = $region9
    $region8: #{tpu_custom_call.1} parent=1 // pred_region
      _
    $region9: #{tpu_custom_call.1} parent=1 // pred_fallthru
      _
    // Predicated region
    $region10: #{tpu_custom_call.1} parent=1 // pred_check
      _
    $region11: #{tpu_custom_call.1} parent=1 // pred_check_branch
      %16 = sbr.rel (0) target = $region13
    $region12: #{tpu_custom_call.1} parent=1 // pred_region
      _
    $region13: #{tpu_custom_call.1} parent=1 // pred_fallthru
      _
    // Predicated region
    $region14: #{tpu_custom_call.1} parent=1 // pred_check
      _
    $region15: #{tpu_custom_call.1} parent=1 // pred_check_branch
      %18 = sbr.rel (0) target = $region17
    $region16: #{tpu_custom_call.1} parent=1 // pred_region
      _
    $region17: #{tpu_custom_call.1} parent=1 // pred_fallthru
      _
    // Predicated region
    $region18: #{tpu_custom_call.1} parent=1 // pred_check
      _
    $region19: #{tpu_custom_call.1} parent=1 // pred_check_branch
      %20 = sbr.rel (0) target = $region21
    $region20: #{tpu_custom_call.1} parent=1 // pred_region
      _
    $region21: #{tpu_custom_call.1} parent=1 // pred_fallthru
      _
    %v22 = vld [vmem:[%s4] sm:$0x1]
    %v23 = vld [vmem:[%s4 + $0x1] sm:$0x1]
    %v24 = vld [vmem:[%s4 + $0x2] sm:$0x1]
    %v25 = vld [vmem:[%s4 + $0x3] sm:$0x1]
    %v26 = vld [vmem:[%s0] sm:$0xf]
    %v27 = vld [vmem:[%s0 + $0x4] sm:$0xf]
    %v28 = vld [vmem:[%s0 + $0x8] sm:$0xf]
    %v29 = vld [vmem:[%s0 + $0xc] sm:$0xf]
    %v30 = vld [vmem:[%s1] sm:$0xf]
    %v31 = vld [vmem:[%s1 + $0x4] sm:$0xf]
    %v32 = vld [vmem:[%s1 + $0x8] sm:$0xf]
    %v33 = vld [vmem:[%s1 + $0xc] sm:$0xf]
    %v34 = vld [vmem:[%s1 + $0x10] sm:$0xf]
    %v35 = vld [vmem:[%s1 + $0x14] sm:$0xf]
    %v36 = vld [vmem:[%s1 + $0x18] sm:$0xf]
    %v37 = vld [vmem:[%s1 + $0x1c] sm:$0xf]
    %v42 = vunpack.c.l.b16 %v26
    %v43 = vunpack.c.l.b16 %v27
    %v44 = vunpack.c.l.b16 %v28
    %v45 = vunpack.c.l.b16 %v29
    %v46 = vpack.c.b16 %v43, %v42
    %v47 = vpack.c.b16 %v45, %v44
    %v56 = vunpack.c.l.b16 %v30
    %v57 = vunpack.c.l.b16 %v31
    %v58 = vunpack.c.l.b16 %v32
    %v59 = vunpack.c.l.b16 %v33
    %v60 = vunpack.c.l.b16 %v34
    %v61 = vunpack.c.l.b16 %v35
    %v62 = vunpack.c.l.b16 %v36
    %v63 = vunpack.c.l.b16 %v37
    %v64 = vpack.c.b16 %v57, %v56
    %v65 = vpack.c.b16 %v59, %v58
    %v66 = vpack.c.b16 %v61, %v60
    %v67 = vpack.c.b16 %v63, %v62
    %vm72 = vcmask 523264
    %v74 = vsel %vm72, %v46, 0
    %v77 = vsel %vm72, %v47, 0
    %79 = vmatpush.bf16.msra.mxu0 0
    %80 = vmatpush.bf16.msra.mxu0 0
    %81 = vmatpush.bf16.msra.mxu0 0
    %82 = vmatpush.bf16.msra.mxu0 0
    %83 = vmatpush.bf16.msra.mxu0 %v67
    %84 = vmatpush.bf16.msra.mxu0 %v66
    %85 = vmatpush.bf16.msra.mxu0 %v65
    %86 = vmatpush.bf16.msra.mxu0 %v64
    %87 = vmatmul.bf16.gmra.mxu0 %v74
    %v88 = vpop.f32.mrf.mxu0
    %v89 = vadd.f32 0.0, %v88
    %v90 = vpop.f32.mrf.mxu0
    %v91 = vadd.f32 0.0, %v90
    %92 = vmatmul.bf16.gmra.mxu0 %v77
    %v93 = vpop.f32.mrf.mxu0
    %v94 = vadd.f32 0.0, %v93
    %v95 = vpop.f32.mrf.mxu0
    %v96 = vadd.f32 0.0, %v95
    %97 = vdwg.mxu0
    %v98 = vadd.f32 %v89, %v91
    %v99 = vadd.f32 %v98, %v94
    %v100 = vadd.f32 %v99, %v96
    %v101 = vrot.slane %v100, 4
    %v102 = vadd.f32 %v100, %v101
    %v103 = vrot.slane %v102, 2
    %v104 = vadd.f32 %v102, %v103
    %v105 = vrot.slane %v104, 1
    %v106 = vadd.f32 %v104, %v105
    %v107 = vmul.f32 %v106, 0.03125
    %v108 = vsub.f32 %v89, %v107
    %v109 = vsub.f32 %v91, %v107
    %v110 = vsub.f32 %v94, %v107
    %v111 = vsub.f32 %v96, %v107
    %v112 = vmul.f32 %v108, %v108
    %v113 = vmul.f32 %v109, %v109
    %v114 = vmul.f32 %v110, %v110
    %v115 = vmul.f32 %v111, %v111
    %v116 = vadd.f32 %v112, %v113
    %v117 = vadd.f32 %v116, %v114
    %v118 = vadd.f32 %v117, %v115
    %v119 = vrot.slane %v118, 4
    %v120 = vadd.f32 %v118, %v119
    %v121 = vrot.slane %v120, 2
    %v122 = vadd.f32 %v120, %v121
    %v123 = vrot.slane %v122, 1
    %v124 = vadd.f32 %v122, %v123
    %v125 = vmul.f32 %v124, 0.03125
    %v126 = vadd.f32 %v125, 1e-05
    %v127 = vrsqrt.pop %v126
    %v128 = vmul.f32 %v127, %v126
    %v129 = vmul.f32 %v128, %v127
    %v130 = vmul.f32 0.5, %v129
    %v131 = vsub.f32 1.5, %v130
    %v132 = vmul.f32 %v127, %v131
    %vm133 = vweird.f32 %v126
    %vm134 = vweird.f32 %v127
    %vm135 = vmor %vm133, %vm134
    %v136 = vsel %vm135, %v127, %v132
    %v137 = vmul.f32 %v136, %v22
    %v138 = vperm.slane %v137, 0
    %v139 = vmul.f32 %v108, %v138
    %v140 = vmul.f32 %v109, %v138
    %v141 = vmul.f32 %v110, %v138
    %v142 = vmul.f32 %v111, %v138
    %v143 = vperm.slane %v23, 0
    %v144 = vadd.f32 %v139, %v143
    %v145 = vadd.f32 %v140, %v143
    %v146 = vadd.f32 %v141, %v143
    %v147 = vadd.f32 %v142, %v143
    %152 = vrot.lane.b32.xlu0 %v144, 64
    %v153 = vpop.permute.xlu0 %152
    %154 = vrot.lane.b32.xlu0 %v145, 64
    %v155 = vpop.permute.xlu0 %154
    %156 = vrot.lane.b32.xlu0 %v146, 64
    %v157 = vpop.permute.xlu0 %156
    %158 = vrot.lane.b32.xlu0 %v147, 64
    %v159 = vpop.permute.xlu0 %158
    %164 = vst.msk [vmem:[#allocation2] sm:$0xff] %vm72, %v153
    %165 = vst.msk [vmem:[#allocation2 + $0x8] sm:$0xff] %vm72, %v155
    %166 = vst.msk [vmem:[#allocation2 + $0x10] sm:$0xff] %vm72, %v157
    %167 = vst.msk [vmem:[#allocation2 + $0x18] sm:$0xff] %vm72, %v159
    %v168 = vmax.f32 %v144, 0.0
    %v169 = vmax.f32 %v145, 0.0
    %v170 = vmax.f32 %v146, 0.0
    %v171 = vmax.f32 %v147, 0.0
    %172 = vst.msk [vmem:[#allocation3] sm:$0xff] %vm72, 0.0
    %173 = vst.msk [vmem:[#allocation3 + $0x20] sm:$0xff] %vm72, 0.0
    %174 = vst.msk [vmem:[#allocation3 + $0x18] sm:$0xff] %vm72, 0.0
    %175 = vst.msk [vmem:[#allocation3 + $0x38] sm:$0xff] %vm72, 0.0
    %176 = vst.msk [vmem:[#allocation3 + $0x8] sm:$0xff] %vm72, %v168
    %177 = vst.msk [vmem:[#allocation3 + $0x10] sm:$0xff] %vm72, %v169
    %178 = vst.msk [vmem:[#allocation3 + $0x28] sm:$0xff] %vm72, %v170
    %179 = vst.msk [vmem:[#allocation3 + $0x30] sm:$0xff] %vm72, %v171
    %v180 = vld [vmem:[#allocation3 + $0x4] sm:$0xff]
    %v181 = vld [vmem:[#allocation3 + $0xc] sm:$0xff]
    %v182 = vld [vmem:[#allocation3 + $0x24] sm:$0xff]
    %v183 = vld [vmem:[#allocation3 + $0x2c] sm:$0xff]
    %v184 = vpack.c.bf16 %v180, %v180
    %v185 = vpack.c.bf16 %v181, %v181
    %v186 = vpack.c.bf16 %v182, %v182
    %v187 = vpack.c.bf16 %v183, %v183
    %vm188 = vcmask 519168
    %189 = vst.msk [vmem:[#allocation4] sm:$0xf] %vm188, %v184
    %190 = vst.msk [vmem:[#allocation4 + $0x14] sm:$0xf] %vm188, %v185
    %191 = vst.msk [vmem:[#allocation4 + $0x28] sm:$0xf] %vm188, %v186
    %192 = vst.msk [vmem:[#allocation4 + $0x3c] sm:$0xf] %vm188, %v187
    %v193 = vld [vmem:[#allocation3 + $0x5] sm:$0xff]
    %v194 = vld [vmem:[#allocation3 + $0xd] sm:$0xff]
    %v195 = vld [vmem:[#allocation3 + $0x25] sm:$0xff]
    %v196 = vld [vmem:[#allocation3 + $0x2d] sm:$0xff]
    %v197 = vpack.c.bf16 %v193, %v193
    %v198 = vpack.c.bf16 %v194, %v194
    %v199 = vpack.c.bf16 %v195, %v195
    %v200 = vpack.c.bf16 %v196, %v196
    %205 = vrot.lane.b32.xlu0 %v197, 64
    %v206 = vpop.permute.xlu0 %205
    %207 = vrot.lane.b32.xlu0 %v198, 64
    %v208 = vpop.permute.xlu0 %207
    %209 = vrot.lane.b32.xlu0 %v199, 64
    %v210 = vpop.permute.xlu0 %209
    %211 = vrot.lane.b32.xlu0 %v200, 64
    %v212 = vpop.permute.xlu0 %211
    %vm217 = vcmask 1043968
    %218 = vst.msk [vmem:[#allocation4] sm:$0xf] %vm217, %v206
    %219 = vst.msk [vmem:[#allocation4 + $0x14] sm:$0xf] %vm217, %v208
    %220 = vst.msk [vmem:[#allocation4 + $0x28] sm:$0xf] %vm217, %v210
    %221 = vst.msk [vmem:[#allocation4 + $0x3c] sm:$0xf] %vm217, %v212
    %v222 = vld [vmem:[#allocation3 + $0x6] sm:$0xff]
    %v223 = vld [vmem:[#allocation3 + $0xe] sm:$0xff]
    %v224 = vld [vmem:[#allocation3 + $0x26] sm:$0xff]
    %v225 = vld [vmem:[#allocation3 + $0x2e] sm:$0xff]
    %v226 = vpack.c.bf16 %v222, %v222
    %v227 = vpack.c.bf16 %v223, %v223
    %v228 = vpack.c.bf16 %v224, %v224
    %v229 = vpack.c.bf16 %v225, %v225
    %230 = vst.msk [vmem:[#allocation4 + $0x4] sm:$0xf] %vm188, %v226
    %231 = vst.msk [vmem:[#allocation4 + $0x18] sm:$0xf] %vm188, %v227
    %232 = vst.msk [vmem:[#allocation4 + $0x2c] sm:$0xf] %vm188, %v228
    %233 = vst.msk [vmem:[#allocation4 + $0x40] sm:$0xf] %vm188, %v229
    %v234 = vld [vmem:[#allocation3 + $0x7] sm:$0xff]
    %v235 = vld [vmem:[#allocation3 + $0xf] sm:$0xff]
    %v236 = vld [vmem:[#allocation3 + $0x27] sm:$0xff]
    %v237 = vld [vmem:[#allocation3 + $0x2f] sm:$0xff]
    %v238 = vpack.c.bf16 %v234, %v234
    %v239 = vpack.c.bf16 %v235, %v235
    %v240 = vpack.c.bf16 %v236, %v236
    %v241 = vpack.c.bf16 %v237, %v237
    %246 = vrot.lane.b32.xlu0 %v238, 64
    %v247 = vpop.permute.xlu0 %246
    %248 = vrot.lane.b32.xlu0 %v239, 64
    %v249 = vpop.permute.xlu0 %248
    %250 = vrot.lane.b32.xlu0 %v240, 64
    %v251 = vpop.permute.xlu0 %250
    %252 = vrot.lane.b32.xlu0 %v241, 64
    %v253 = vpop.permute.xlu0 %252
    %258 = vst.msk [vmem:[#allocation4 + $0x4] sm:$0xf] %vm217, %v247
    %259 = vst.msk [vmem:[#allocation4 + $0x18] sm:$0xf] %vm217, %v249
    %260 = vst.msk [vmem:[#allocation4 + $0x2c] sm:$0xf] %vm217, %v251
    %261 = vst.msk [vmem:[#allocation4 + $0x40] sm:$0xf] %vm217, %v253
    %v262 = vld [vmem:[#allocation3 + $0x8] sm:$0xff]
    %v263 = vld [vmem:[#allocation3 + $0x10] sm:$0xff]
    %v264 = vld [vmem:[#allocation3 + $0x28] sm:$0xff]
    %v265 = vld [vmem:[#allocation3 + $0x30] sm:$0xff]
    %v266 = vpack.c.bf16 %v262, %v262
    %v267 = vpack.c.bf16 %v263, %v263
    %v268 = vpack.c.bf16 %v264, %v264
    %v269 = vpack.c.bf16 %v265, %v265
    %270 = vst.msk [vmem:[#allocation4 + $0x8] sm:$0xf] %vm188, %v266
    %271 = vst.msk [vmem:[#allocation4 + $0x1c] sm:$0xf] %vm188, %v267
    %272 = vst.msk [vmem:[#allocation4 + $0x30] sm:$0xf] %vm188, %v268
    %273 = vst.msk [vmem:[#allocation4 + $0x44] sm:$0xf] %vm188, %v269
    %v274 = vld [vmem:[#allocation3 + $0x9] sm:$0xff]
    %v275 = vld [vmem:[#allocation3 + $0x11] sm:$0xff]
    %v276 = vld [vmem:[#allocation3 + $0x29] sm:$0xff]
    %v277 = vld [vmem:[#allocation3 + $0x31] sm:$0xff]
    %v278 = vpack.c.bf16 %v274, %v274
    %v279 = vpack.c.bf16 %v275, %v275
    %v280 = vpack.c.bf16 %v276, %v276
    %v281 = vpack.c.bf16 %v277, %v277
    %286 = vrot.lane.b32.xlu0 %v278, 64
    %v287 = vpop.permute.xlu0 %286
    %288 = vrot.lane.b32.xlu0 %v279, 64
    %v289 = vpop.permute.xlu0 %288
    %290 = vrot.lane.b32.xlu0 %v280, 64
    %v291 = vpop.permute.xlu0 %290
    %292 = vrot.lane.b32.xlu0 %v281, 64
    %v293 = vpop.permute.xlu0 %292
    %298 = vst.msk [vmem:[#allocation4 + $0x8] sm:$0xf] %vm217, %v287
    %299 = vst.msk [vmem:[#allocation4 + $0x1c] sm:$0xf] %vm217, %v289
    %300 = vst.msk [vmem:[#allocation4 + $0x30] sm:$0xf] %vm217, %v291
    %301 = vst.msk [vmem:[#allocation4 + $0x44] sm:$0xf] %vm217, %v293
    %v302 = vld [vmem:[#allocation3 + $0xa] sm:$0xff]
    %v303 = vld [vmem:[#allocation3 + $0x12] sm:$0xff]
    %v304 = vld [vmem:[#allocation3 + $0x2a] sm:$0xff]
    %v305 = vld [vmem:[#allocation3 + $0x32] sm:$0xff]
    %v306 = vpack.c.bf16 %v302, %v302
    %v307 = vpack.c.bf16 %v303, %v303
    %v308 = vpack.c.bf16 %v304, %v304
    %v309 = vpack.c.bf16 %v305, %v305
    %310 = vst.msk [vmem:[#allocation4 + $0xc] sm:$0xf] %vm188, %v306
    %311 = vst.msk [vmem:[#allocation4 + $0x20] sm:$0xf] %vm188, %v307
    %312 = vst.msk [vmem:[#allocation4 + $0x34] sm:$0xf] %vm188, %v308
    %313 = vst.msk [vmem:[#allocation4 + $0x48] sm:$0xf] %vm188, %v309
    %v314 = vld [vmem:[#allocation3 + $0xb] sm:$0xff]
    %v315 = vld [vmem:[#allocation3 + $0x13] sm:$0xff]
    %v316 = vld [vmem:[#allocation3 + $0x2b] sm:$0xff]
    %v317 = vld [vmem:[#allocation3 + $0x33] sm:$0xff]
    %v318 = vpack.c.bf16 %v314, %v314
    %v319 = vpack.c.bf16 %v315, %v315
    %v320 = vpack.c.bf16 %v316, %v316
    %v321 = vpack.c.bf16 %v317, %v317
    %326 = vrot.lane.b32.xlu0 %v318, 64
    %v327 = vpop.permute.xlu0 %326
    %328 = vrot.lane.b32.xlu0 %v319, 64
    %v329 = vpop.permute.xlu0 %328
    %330 = vrot.lane.b32.xlu0 %v320, 64
    %v331 = vpop.permute.xlu0 %330
    %332 = vrot.lane.b32.xlu0 %v321, 64
    %v333 = vpop.permute.xlu0 %332
    %338 = vst.msk [vmem:[#allocation4 + $0xc] sm:$0xf] %vm217, %v327
    %339 = vst.msk [vmem:[#allocation4 + $0x20] sm:$0xf] %vm217, %v329
    %340 = vst.msk [vmem:[#allocation4 + $0x34] sm:$0xf] %vm217, %v331
    %341 = vst.msk [vmem:[#allocation4 + $0x48] sm:$0xf] %vm217, %v333
    %v342 = vld [vmem:[#allocation3 + $0xc] sm:$0xff]
    %v343 = vld [vmem:[#allocation3 + $0x14] sm:$0xff]
    %v344 = vld [vmem:[#allocation3 + $0x2c] sm:$0xff]
    %v345 = vld [vmem:[#allocation3 + $0x34] sm:$0xff]
    %v346 = vpack.c.bf16 %v342, %v342
    %v347 = vpack.c.bf16 %v343, %v343
    %v348 = vpack.c.bf16 %v344, %v344
    %v349 = vpack.c.bf16 %v345, %v345
    %350 = vst.msk [vmem:[#allocation4 + $0x10] sm:$0xf] %vm188, %v346
    %351 = vst.msk [vmem:[#allocation4 + $0x24] sm:$0xf] %vm188, %v347
    %352 = vst.msk [vmem:[#allocation4 + $0x38] sm:$0xf] %vm188, %v348
    %353 = vst.msk [vmem:[#allocation4 + $0x4c] sm:$0xf] %vm188, %v349
    %v354 = vld [vmem:[#allocation4] sm:$0xff]
    %v355 = vld [vmem:[#allocation4 + $0x8] sm:$0xff]
    %v356 = vld [vmem:[#allocation4 + $0x10] sm:$0xf]
    %v357 = vld [vmem:[#allocation4 + $0x14] sm:$0xff]
    %v358 = vld [vmem:[#allocation4 + $0x1c] sm:$0xff]
    %v359 = vld [vmem:[#allocation4 + $0x24] sm:$0xf]
    %v360 = vld [vmem:[#allocation4 + $0x28] sm:$0xff]
    %v361 = vld [vmem:[#allocation4 + $0x30] sm:$0xff]
    %v362 = vld [vmem:[#allocation4 + $0x38] sm:$0xf]
    %v363 = vld [vmem:[#allocation4 + $0x3c] sm:$0xff]
    %v364 = vld [vmem:[#allocation4 + $0x44] sm:$0xff]
    %v365 = vld [vmem:[#allocation4 + $0x4c] sm:$0xf]
    %v366 = vld [vmem:[%s2] sm:$0xf]
    %v367 = vld [vmem:[%s2 + $0x4] sm:$0xf]
    %v368 = vld [vmem:[%s2 + $0x8] sm:$0xf]
    %v369 = vld [vmem:[%s2 + $0xc] sm:$0xf]
    %v370 = vld [vmem:[%s2 + $0x10] sm:$0xf]
    %v371 = vld [vmem:[%s2 + $0x14] sm:$0xf]
    %v372 = vld [vmem:[%s2 + $0x18] sm:$0xf]
    %v373 = vld [vmem:[%s2 + $0x1c] sm:$0xf]
    %v374 = vld [vmem:[%s2 + $0x20] sm:$0xf]
    %v375 = vld [vmem:[%s2 + $0x24] sm:$0xf]
    %v376 = vld [vmem:[%s2 + $0x28] sm:$0xf]
    %v377 = vld [vmem:[%s2 + $0x2c] sm:$0xf]
    %v378 = vld [vmem:[%s2 + $0x30] sm:$0xf]
    %v379 = vld [vmem:[%s2 + $0x34] sm:$0xf]
    %v380 = vld [vmem:[%s2 + $0x38] sm:$0xf]
    %v381 = vld [vmem:[%s2 + $0x3c] sm:$0xf]
    %v382 = vld [vmem:[%s2 + $0x40] sm:$0xf]
    %v383 = vld [vmem:[%s2 + $0x44] sm:$0xf]
    %v384 = vld [vmem:[%s2 + $0x48] sm:$0xf]
    %v385 = vld [vmem:[%s2 + $0x4c] sm:$0xf]
    %v386 = vld [vmem:[%s2 + $0x50] sm:$0xf]
    %v387 = vld [vmem:[%s2 + $0x54] sm:$0xf]
    %v388 = vld [vmem:[%s2 + $0x58] sm:$0xf]
    %v389 = vld [vmem:[%s2 + $0x5c] sm:$0xf]
    %v390 = vld [vmem:[%s2 + $0x60] sm:$0xf]
    %v391 = vld [vmem:[%s2 + $0x64] sm:$0xf]
    %v392 = vld [vmem:[%s2 + $0x68] sm:$0xf]
    %v393 = vld [vmem:[%s2 + $0x6c] sm:$0xf]
    %v394 = vld [vmem:[%s2 + $0x70] sm:$0xf]
    %v395 = vld [vmem:[%s2 + $0x74] sm:$0xf]
    %v396 = vld [vmem:[%s2 + $0x78] sm:$0xf]
    %v397 = vld [vmem:[%s2 + $0x7c] sm:$0xf]
    %v398 = vld [vmem:[%s2 + $0x80] sm:$0xf]
    %v399 = vld [vmem:[%s2 + $0x84] sm:$0xf]
    %v400 = vld [vmem:[%s2 + $0x88] sm:$0xf]
    %v401 = vld [vmem:[%s2 + $0x8c] sm:$0xf]
    %v402 = vld [vmem:[%s2 + $0x90] sm:$0xf]
    %v403 = vld [vmem:[%s2 + $0x94] sm:$0xf]
    %v404 = vld [vmem:[%s2 + $0x98] sm:$0xf]
    %v405 = vld [vmem:[%s2 + $0x9c] sm:$0xf]
    %v406 = vld [vmem:[%s2 + $0xa0] sm:$0xf]
    %v407 = vld [vmem:[%s2 + $0xa4] sm:$0xf]
    %v408 = vld [vmem:[%s2 + $0xa8] sm:$0xf]
    %v409 = vld [vmem:[%s2 + $0xac] sm:$0xf]
    %v410 = vld [vmem:[%s2 + $0xb0] sm:$0xf]
    %v411 = vld [vmem:[%s2 + $0xb4] sm:$0xf]
    %v412 = vld [vmem:[%s2 + $0xb8] sm:$0xf]
    %v413 = vld [vmem:[%s2 + $0xbc] sm:$0xf]
    %v414 = vld [vmem:[%s2 + $0xc0] sm:$0xf]
    %v415 = vld [vmem:[%s2 + $0xc4] sm:$0xf]
    %v416 = vld [vmem:[%s2 + $0xc8] sm:$0xf]
    %v417 = vld [vmem:[%s2 + $0xcc] sm:$0xf]
    %v418 = vld [vmem:[%s2 + $0xd0] sm:$0xf]
    %v419 = vld [vmem:[%s2 + $0xd4] sm:$0xf]
    %v420 = vld [vmem:[%s2 + $0xd8] sm:$0xf]
    %v421 = vld [vmem:[%s2 + $0xdc] sm:$0xf]
    %v422 = vld [vmem:[%s2 + $0xe0] sm:$0xf]
    %v423 = vld [vmem:[%s2 + $0xe4] sm:$0xf]
    %v424 = vld [vmem:[%s2 + $0xe8] sm:$0xf]
    %v425 = vld [vmem:[%s2 + $0xec] sm:$0xf]
    %v426 = vld [vmem:[%s2 + $0xf0] sm:$0xf]
    %v427 = vld [vmem:[%s2 + $0xf4] sm:$0xf]
    %v428 = vld [vmem:[%s2 + $0xf8] sm:$0xf]
    %v429 = vld [vmem:[%s2 + $0xfc] sm:$0xf]
    %v430 = vld [vmem:[%s2 + $0x100] sm:$0xf]
    %v431 = vld [vmem:[%s2 + $0x104] sm:$0xf]
    %v432 = vld [vmem:[%s2 + $0x108] sm:$0xf]
    %v433 = vld [vmem:[%s2 + $0x10c] sm:$0xf]
    %v434 = vld [vmem:[%s2 + $0x110] sm:$0xf]
    %v435 = vld [vmem:[%s2 + $0x114] sm:$0xf]
    %v436 = vld [vmem:[%s2 + $0x118] sm:$0xf]
    %v437 = vld [vmem:[%s2 + $0x11c] sm:$0xf]
    %v450 = vunpack.c.l.b16 %v354
    %v451 = vunpack.c.h.b16 %v354
    %v452 = vunpack.c.l.b16 %v355
    %v453 = vunpack.c.h.b16 %v355
    %v454 = vunpack.c.l.b16 %v356
    %v455 = vunpack.c.l.b16 %v357
    %v456 = vunpack.c.h.b16 %v357
    %v457 = vunpack.c.l.b16 %v358
    %v458 = vunpack.c.h.b16 %v358
    %v459 = vunpack.c.l.b16 %v359
    %v460 = vunpack.c.l.b16 %v360
    %v461 = vunpack.c.h.b16 %v360
    %v462 = vunpack.c.l.b16 %v361
    %v463 = vunpack.c.h.b16 %v361
    %v464 = vunpack.c.l.b16 %v362
    %v465 = vunpack.c.l.b16 %v363
    %v466 = vunpack.c.h.b16 %v363
    %v467 = vunpack.c.l.b16 %v364
    %v468 = vunpack.c.h.b16 %v364
    %v469 = vunpack.c.l.b16 %v365
    %v470 = vpack.c.b16 %v455, %v450
    %v471 = vpack.c.b16 %v456, %v451
    %v472 = vpack.c.b16 %v457, %v452
    %v473 = vpack.c.b16 %v458, %v453
    %v474 = vpack.c.b16 %v459, %v454
    %v475 = vpack.c.b16 %v465, %v460
    %v476 = vpack.c.b16 %v466, %v461
    %v477 = vpack.c.b16 %v467, %v462
    %v478 = vpack.c.b16 %v468, %v463
    %v479 = vpack.c.b16 %v469, %v464
    %v560 = vunpack.c.l.b16 %v366
    %v561 = vunpack.c.l.b16 %v367
    %v562 = vunpack.c.l.b16 %v368
    %v563 = vunpack.c.l.b16 %v369
    %v564 = vunpack.c.l.b16 %v370
    %v565 = vunpack.c.l.b16 %v371
    %v566 = vunpack.c.l.b16 %v372
    %v567 = vunpack.c.l.b16 %v373
    %v568 = vunpack.c.l.b16 %v374
    %v569 = vunpack.c.l.b16 %v375
    %v570 = vunpack.c.l.b16 %v376
    %v571 = vunpack.c.l.b16 %v377
    %v572 = vunpack.c.l.b16 %v378
    %v573 = vunpack.c.l.b16 %v379
    %v574 = vunpack.c.l.b16 %v380
    %v575 = vunpack.c.l.b16 %v381
    %v576 = vunpack.c.l.b16 %v382
    %v577 = vunpack.c.l.b16 %v383
    %v578 = vunpack.c.l.b16 %v384
    %v579 = vunpack.c.l.b16 %v385
    %v580 = vunpack.c.l.b16 %v386
    %v581 = vunpack.c.l.b16 %v387
    %v582 = vunpack.c.l.b16 %v388
    %v583 = vunpack.c.l.b16 %v389
    %v584 = vunpack.c.l.b16 %v390
    %v585 = vunpack.c.l.b16 %v391
    %v586 = vunpack.c.l.b16 %v392
    %v587 = vunpack.c.l.b16 %v393
    %v588 = vunpack.c.l.b16 %v394
    %v589 = vunpack.c.l.b16 %v395
    %v590 = vunpack.c.l.b16 %v396
    %v591 = vunpack.c.l.b16 %v397
    %v592 = vunpack.c.l.b16 %v398
    %v593 = vunpack.c.l.b16 %v399
    %v594 = vunpack.c.l.b16 %v400
    %v595 = vunpack.c.l.b16 %v401
    %v596 = vunpack.c.l.b16 %v402
    %v597 = vunpack.c.l.b16 %v403
    %v598 = vunpack.c.l.b16 %v404
    %v599 = vunpack.c.l.b16 %v405
    %v600 = vunpack.c.l.b16 %v406
    %v601 = vunpack.c.l.b16 %v407
    %v602 = vunpack.c.l.b16 %v408
    %v603 = vunpack.c.l.b16 %v409
    %v604 = vunpack.c.l.b16 %v410
    %v605 = vunpack.c.l.b16 %v411
    %v606 = vunpack.c.l.b16 %v412
    %v607 = vunpack.c.l.b16 %v413
    %v608 = vunpack.c.l.b16 %v414
    %v609 = vunpack.c.l.b16 %v415
    %v610 = vunpack.c.l.b16 %v416
    %v611 = vunpack.c.l.b16 %v417
    %v612 = vunpack.c.l.b16 %v418
    %v613 = vunpack.c.l.b16 %v419
    %v614 = vunpack.c.l.b16 %v420
    %v615 = vunpack.c.l.b16 %v421
    %v616 = vunpack.c.l.b16 %v422
    %v617 = vunpack.c.l.b16 %v423
    %v618 = vunpack.c.l.b16 %v424
    %v619 = vunpack.c.l.b16 %v425
    %v620 = vunpack.c.l.b16 %v426
    %v621 = vunpack.c.l.b16 %v427
    %v622 = vunpack.c.l.b16 %v428
    %v623 = vunpack.c.l.b16 %v429
    %v624 = vunpack.c.l.b16 %v430
    %v625 = vunpack.c.l.b16 %v431
    %v626 = vunpack.c.l.b16 %v432
    %v627 = vunpack.c.l.b16 %v433
    %v628 = vunpack.c.l.b16 %v434
    %v629 = vunpack.c.l.b16 %v435
    %v630 = vunpack.c.l.b16 %v436
    %v631 = vunpack.c.l.b16 %v437
    %v632 = vpack.c.b16 %v561, %v560
    %v633 = vpack.c.b16 %v563, %v562
    %v634 = vpack.c.b16 %v565, %v564
    %v635 = vpack.c.b16 %v567, %v566
    %v636 = vpack.c.b16 %v569, %v568
    %v637 = vpack.c.b16 %v571, %v570
    %v638 = vpack.c.b16 %v573, %v572
    %v639 = vpack.c.b16 %v575, %v574
    %v640 = vpack.c.b16 %v577, %v576
    %v641 = vpack.c.b16 %v579, %v578
    %v642 = vpack.c.b16 %v581, %v580
    %v643 = vpack.c.b16 %v583, %v582
    %v644 = vpack.c.b16 %v585, %v584
    %v645 = vpack.c.b16 %v587, %v586
    %v646 = vpack.c.b16 %v589, %v588
    %v647 = vpack.c.b16 %v591, %v590
    %v648 = vpack.c.b16 %v593, %v592
    %v649 = vpack.c.b16 %v595, %v594
    %v650 = vpack.c.b16 %v597, %v596
    %v651 = vpack.c.b16 %v599, %v598
    %v652 = vpack.c.b16 %v601, %v600
    %v653 = vpack.c.b16 %v603, %v602
    %v654 = vpack.c.b16 %v605, %v604
    %v655 = vpack.c.b16 %v607, %v606
    %v656 = vpack.c.b16 %v609, %v608
    %v657 = vpack.c.b16 %v611, %v610
    %v658 = vpack.c.b16 %v613, %v612
    %v659 = vpack.c.b16 %v615, %v614
    %v660 = vpack.c.b16 %v617, %v616
    %v661 = vpack.c.b16 %v619, %v618
    %v662 = vpack.c.b16 %v621, %v620
    %v663 = vpack.c.b16 %v623, %v622
    %v664 = vpack.c.b16 %v625, %v624
    %v665 = vpack.c.b16 %v627, %v626
    %v666 = vpack.c.b16 %v629, %v628
    %v667 = vpack.c.b16 %v631, %v630
    %v705 = vsel %vm72, %v474, 0
    %v708 = vsel %vm72, %v479, 0
    %710 = vmatpush.bf16.msra.mxu0 %v639
    %711 = vmatpush.bf16.msra.mxu0 %v638
    %712 = vmatpush.bf16.msra.mxu0 %v637
    %713 = vmatpush.bf16.msra.mxu0 %v636
    %714 = vmatpush.bf16.msra.mxu0 %v635
    %715 = vmatpush.bf16.msra.mxu0 %v634
    %716 = vmatpush.bf16.msra.mxu0 %v633
    %717 = vmatpush.bf16.msra.mxu0 %v632
    %718 = vmatmul.bf16.gmra.mxu0 %v470
    %v719 = vpop.f32.mrf.mxu0
    %v720 = vadd.f32 0.0, %v719
    %v721 = vpop.f32.mrf.mxu0
    %v722 = vadd.f32 0.0, %v721
    %723 = vmatmul.bf16.gmra.mxu0 %v475
    %v724 = vpop.f32.mrf.mxu0
    %v725 = vadd.f32 0.0, %v724
    %v726 = vpop.f32.mrf.mxu0
    %v727 = vadd.f32 0.0, %v726
    %728 = vdwg.mxu0
    %729 = vmatpush.bf16.msra.mxu0 %v647
    %730 = vmatpush.bf16.msra.mxu0 %v646
    %731 = vmatpush.bf16.msra.mxu0 %v645
    %732 = vmatpush.bf16.msra.mxu0 %v644
    %733 = vmatpush.bf16.msra.mxu0 %v643
    %734 = vmatpush.bf16.msra.mxu0 %v642
    %735 = vmatpush.bf16.msra.mxu0 %v641
    %736 = vmatpush.bf16.msra.mxu0 %v640
    %737 = vmatmul.bf16.gmra.mxu0 %v471
    %v738 = vpop.f32.mrf.mxu0
    %v739 = vadd.f32 %v720, %v738
    %v740 = vpop.f32.mrf.mxu0
    %v741 = vadd.f32 %v722, %v740
    %742 = vmatmul.bf16.gmra.mxu0 %v476
    %v743 = vpop.f32.mrf.mxu0
    %v744 = vadd.f32 %v725, %v743
    %v745 = vpop.f32.mrf.mxu0
    %v746 = vadd.f32 %v727, %v745
    %747 = vdwg.mxu0
    %748 = vmatpush.bf16.msra.mxu0 %v655
    %749 = vmatpush.bf16.msra.mxu0 %v654
    %750 = vmatpush.bf16.msra.mxu0 %v653
    %751 = vmatpush.bf16.msra.mxu0 %v652
    %752 = vmatpush.bf16.msra.mxu0 %v651
    %753 = vmatpush.bf16.msra.mxu0 %v650
    %754 = vmatpush.bf16.msra.mxu0 %v649
    %755 = vmatpush.bf16.msra.mxu0 %v648
    %756 = vmatmul.bf16.gmra.mxu0 %v472
    %v757 = vpop.f32.mrf.mxu0
    %v758 = vadd.f32 %v739, %v757
    %v759 = vpop.f32.mrf.mxu0
    %v760 = vadd.f32 %v741, %v759
    %761 = vmatmul.bf16.gmra.mxu0 %v477
    %v762 = vpop.f32.mrf.mxu0
    %v763 = vadd.f32 %v744, %v762
    %v764 = vpop.f32.mrf.mxu0
    %v765 = vadd.f32 %v746, %v764
    %766 = vdwg.mxu0
    %767 = vmatpush.bf16.msra.mxu0 %v663
    %768 = vmatpush.bf16.msra.mxu0 %v662
    %769 = vmatpush.bf16.msra.mxu0 %v661
    %770 = vmatpush.bf16.msra.mxu0 %v660
    %771 = vmatpush.bf16.msra.mxu0 %v659
    %772 = vmatpush.bf16.msra.mxu0 %v658
    %773 = vmatpush.bf16.msra.mxu0 %v657
    %774 = vmatpush.bf16.msra.mxu0 %v656
    %775 = vmatmul.bf16.gmra.mxu0 %v473
    %v776 = vpop.f32.mrf.mxu0
    %v777 = vadd.f32 %v758, %v776
    %v778 = vpop.f32.mrf.mxu0
    %v779 = vadd.f32 %v760, %v778
    %780 = vmatmul.bf16.gmra.mxu0 %v478
    %v781 = vpop.f32.mrf.mxu0
    %v782 = vadd.f32 %v763, %v781
    %v783 = vpop.f32.mrf.mxu0
    %v784 = vadd.f32 %v765, %v783
    %785 = vdwg.mxu0
    %786 = vmatpush.bf16.msra.mxu0 0
    %787 = vmatpush.bf16.msra.mxu0 0
    %788 = vmatpush.bf16.msra.mxu0 0
    %789 = vmatpush.bf16.msra.mxu0 0
    %790 = vmatpush.bf16.msra.mxu0 %v667
    %791 = vmatpush.bf16.msra.mxu0 %v666
    %792 = vmatpush.bf16.msra.mxu0 %v665
    %793 = vmatpush.bf16.msra.mxu0 %v664
    %794 = vmatmul.bf16.gmra.mxu0 %v705
    %v795 = vpop.f32.mrf.mxu0
    %v796 = vadd.f32 %v777, %v795
    %v797 = vpop.f32.mrf.mxu0
    %v798 = vadd.f32 %v779, %v797
    %799 = vmatmul.bf16.gmra.mxu0 %v708
    %v800 = vpop.f32.mrf.mxu0
    %v801 = vadd.f32 %v782, %v800
    %v802 = vpop.f32.mrf.mxu0
    %v803 = vadd.f32 %v784, %v802
    %804 = vdwg.mxu0
    %v805 = vsel %vm72, %v796, 0.0
    %v806 = vsel %vm72, %v798, 0.0
    %v807 = vadd.f32 %v805, %v806
    %v808 = vsel %vm72, %v801, 0.0
    %v809 = vadd.f32 %v807, %v808
    %v810 = vsel %vm72, %v803, 0.0
    %v811 = vadd.f32 %v809, %v810
    %v812 = vrot.slane %v811, 4
    %v813 = vadd.f32 %v811, %v812
    %v814 = vrot.slane %v813, 2
    %v815 = vadd.f32 %v813, %v814
    %v816 = vrot.slane %v815, 1
    %v817 = vadd.f32 %v815, %v816
    %v818 = vmul.f32 %v817, 0.03125
    %v819 = vsub.f32 %v796, %v818
    %v820 = vsub.f32 %v798, %v818
    %v821 = vsub.f32 %v801, %v818
    %v822 = vsub.f32 %v803, %v818
    %v823 = vmul.f32 %v819, %v819
    %v824 = vmul.f32 %v820, %v820
    %v825 = vmul.f32 %v821, %v821
    %v826 = vmul.f32 %v822, %v822
    %v827 = vsel %vm72, %v823, 0.0
    %v828 = vsel %vm72, %v824, 0.0
    %v829 = vadd.f32 %v827, %v828
    %v830 = vsel %vm72, %v825, 0.0
    %v831 = vadd.f32 %v829, %v830
    %v832 = vsel %vm72, %v826, 0.0
    %v833 = vadd.f32 %v831, %v832
    %v834 = vrot.slane %v833, 4
    %v835 = vadd.f32 %v833, %v834
    %v836 = vrot.slane %v835, 2
    %v837 = vadd.f32 %v835, %v836
    %v838 = vrot.slane %v837, 1
    %v839 = vadd.f32 %v837, %v838
    %v840 = vmul.f32 %v839, 0.03125
    %v841 = vadd.f32 %v840, 1e-05
    %v842 = vrsqrt.pop %v841
    %v843 = vmul.f32 %v842, %v841
    %v844 = vmul.f32 %v843, %v842
    %v845 = vmul.f32 0.5, %v844
    %v846 = vsub.f32 1.5, %v845
    %v847 = vmul.f32 %v842, %v846
    %vm848 = vweird.f32 %v841
    %vm849 = vweird.f32 %v842
    %vm850 = vmor %vm848, %vm849
    %v851 = vsel %vm850, %v842, %v847
    %v852 = vmul.f32 %v851, %v24
    %v853 = vperm.slane %v852, 0
    %v854 = vmul.f32 %v819, %v853
    %v855 = vmul.f32 %v820, %v853
    %v856 = vmul.f32 %v821, %v853
    %v857 = vmul.f32 %v822, %v853
    %v858 = vperm.slane %v24, 0
    %860 = vrot.lane.b32.xlu0 %v858, 64
    %v861 = vpop.permute.xlu0 %860
    %v863 = vadd.f32 %v854, %v861
    %v864 = vadd.f32 %v855, %v861
    %v865 = vadd.f32 %v856, %v861
    %v866 = vadd.f32 %v857, %v861
    %v867 = vmax.f32 %v863, 0.0
    %v868 = vmax.f32 %v864, 0.0
    %v869 = vmax.f32 %v865, 0.0
    %v870 = vmax.f32 %v866, 0.0
    %871 = vst.msk [vmem:[#allocation3 + $0x8] sm:$0xff] %vm72, %v867
    %872 = vst.msk [vmem:[#allocation3 + $0x10] sm:$0xff] %vm72, %v868
    %873 = vst.msk [vmem:[#allocation3 + $0x28] sm:$0xff] %vm72, %v869
    %874 = vst.msk [vmem:[#allocation3 + $0x30] sm:$0xff] %vm72, %v870
    %v875 = vld [vmem:[#allocation3 + $0x7] sm:$0xff]
    %v876 = vld [vmem:[#allocation3 + $0xf] sm:$0xff]
    %v877 = vld [vmem:[#allocation3 + $0x27] sm:$0xff]
    %v878 = vld [vmem:[#allocation3 + $0x2f] sm:$0xff]
    %v879 = vpack.c.bf16 %v875, %v875
    %v880 = vpack.c.bf16 %v876, %v876
    %v881 = vpack.c.bf16 %v877, %v877
    %v882 = vpack.c.bf16 %v878, %v878
    %883 = vst.msk [vmem:[#allocation4] sm:$0xf] %vm188, %v879
    %884 = vst.msk [vmem:[#allocation4 + $0x14] sm:$0xf] %vm188, %v880
    %885 = vst.msk [vmem:[#allocation4 + $0x28] sm:$0xf] %vm188, %v881
    %886 = vst.msk [vmem:[#allocation4 + $0x3c] sm:$0xf] %vm188, %v882
    %v887 = vld [vmem:[#allocation3 + $0x8] sm:$0xff]
    %v888 = vld [vmem:[#allocation3 + $0x10] sm:$0xff]
    %v889 = vld [vmem:[#allocation3 + $0x28] sm:$0xff]
    %v890 = vld [vmem:[#allocation3 + $0x30] sm:$0xff]
    %v891 = vpack.c.bf16 %v887, %v887
    %v892 = vpack.c.bf16 %v888, %v888
    %v893 = vpack.c.bf16 %v889, %v889
    %v894 = vpack.c.bf16 %v890, %v890
    %899 = vrot.lane.b32.xlu0 %v891, 64
    %v900 = vpop.permute.xlu0 %899
    %901 = vrot.lane.b32.xlu0 %v892, 64
    %v902 = vpop.permute.xlu0 %901
    %903 = vrot.lane.b32.xlu0 %v893, 64
    %v904 = vpop.permute.xlu0 %903
    %905 = vrot.lane.b32.xlu0 %v894, 64
    %v906 = vpop.permute.xlu0 %905
    %911 = vst.msk [vmem:[#allocation4] sm:$0xf] %vm217, %v900
    %912 = vst.msk [vmem:[#allocation4 + $0x14] sm:$0xf] %vm217, %v902
    %913 = vst.msk [vmem:[#allocation4 + $0x28] sm:$0xf] %vm217, %v904
    %914 = vst.msk [vmem:[#allocation4 + $0x3c] sm:$0xf] %vm217, %v906
    %v915 = vld [vmem:[#allocation3 + $0x9] sm:$0xff]
    %v916 = vld [vmem:[#allocation3 + $0x11] sm:$0xff]
    %v917 = vld [vmem:[#allocation3 + $0x29] sm:$0xff]
    %v918 = vld [vmem:[#allocation3 + $0x31] sm:$0xff]
    %v919 = vpack.c.bf16 %v915, %v915
    %v920 = vpack.c.bf16 %v916, %v916
    %v921 = vpack.c.bf16 %v917, %v917
    %v922 = vpack.c.bf16 %v918, %v918
    %923 = vst.msk [vmem:[#allocation4 + $0x4] sm:$0xf] %vm188, %v919
    %924 = vst.msk [vmem:[#allocation4 + $0x18] sm:$0xf] %vm188, %v920
    %925 = vst.msk [vmem:[#allocation4 + $0x2c] sm:$0xf] %vm188, %v921
    %926 = vst.msk [vmem:[#allocation4 + $0x40] sm:$0xf] %vm188, %v922
    %v927 = vld [vmem:[#allocation4] sm:$0xff]
    %v928 = vld [vmem:[#allocation4 + $0x14] sm:$0xff]
    %v929 = vld [vmem:[#allocation4 + $0x28] sm:$0xff]
    %v930 = vld [vmem:[#allocation4 + $0x3c] sm:$0xff]
    %v931 = vld [vmem:[%s3] sm:$0xf]
    %v932 = vld [vmem:[%s3 + $0x4] sm:$0xf]
    %v933 = vld [vmem:[%s3 + $0x8] sm:$0xf]
    %v934 = vld [vmem:[%s3 + $0xc] sm:$0xf]
    %v935 = vld [vmem:[%s3 + $0x10] sm:$0xf]
    %v936 = vld [vmem:[%s3 + $0x14] sm:$0xf]
    %v937 = vld [vmem:[%s3 + $0x18] sm:$0xf]
    %v938 = vld [vmem:[%s3 + $0x1c] sm:$0xf]
    %v939 = vld [vmem:[%s3 + $0x20] sm:$0xf]
    %v940 = vld [vmem:[%s3 + $0x24] sm:$0xf]
    %v941 = vld [vmem:[%s3 + $0x28] sm:$0xf]
    %v942 = vld [vmem:[%s3 + $0x2c] sm:$0xf]
    %v943 = vld [vmem:[%s3 + $0x30] sm:$0xf]
    %v944 = vld [vmem:[%s3 + $0x34] sm:$0xf]
    %v945 = vld [vmem:[%s3 + $0x38] sm:$0xf]
    %v946 = vld [vmem:[%s3 + $0x3c] sm:$0xf]
    %v947 = vld [vmem:[%s3 + $0x40] sm:$0xf]
    %v948 = vld [vmem:[%s3 + $0x44] sm:$0xf]
    %v949 = vld [vmem:[%s3 + $0x48] sm:$0xf]
    %v950 = vld [vmem:[%s3 + $0x4c] sm:$0xf]
    %v951 = vld [vmem:[%s3 + $0x50] sm:$0xf]
    %v952 = vld [vmem:[%s3 + $0x54] sm:$0xf]
    %v953 = vld [vmem:[%s3 + $0x58] sm:$0xf]
    %v954 = vld [vmem:[%s3 + $0x5c] sm:$0xf]
    %v959 = vunpack.c.l.b16 %v927
    %v960 = vunpack.c.h.b16 %v927
    %v961 = vunpack.c.l.b16 %v928
    %v962 = vunpack.c.h.b16 %v928
    %v963 = vunpack.c.l.b16 %v929
    %v964 = vunpack.c.h.b16 %v929
    %v965 = vunpack.c.l.b16 %v930
    %v966 = vunpack.c.h.b16 %v930
    %v967 = vpack.c.b16 %v961, %v959
    %v968 = vpack.c.b16 %v962, %v960
    %v969 = vpack.c.b16 %v965, %v963
    %v970 = vpack.c.b16 %v966, %v964
    %v997 = vunpack.c.l.b16 %v931
    %v998 = vunpack.c.l.b16 %v932
    %v999 = vunpack.c.l.b16 %v933
    %v1000 = vunpack.c.l.b16 %v934
    %v1001 = vunpack.c.l.b16 %v935
    %v1002 = vunpack.c.l.b16 %v936
    %v1003 = vunpack.c.l.b16 %v937
    %v1004 = vunpack.c.l.b16 %v938
    %v1005 = vunpack.c.l.b16 %v939
    %v1006 = vunpack.c.l.b16 %v940
    %v1007 = vunpack.c.l.b16 %v941
    %v1008 = vunpack.c.l.b16 %v942
    %v1009 = vunpack.c.l.b16 %v943
    %v1010 = vunpack.c.l.b16 %v944
    %v1011 = vunpack.c.l.b16 %v945
    %v1012 = vunpack.c.l.b16 %v946
    %v1013 = vunpack.c.l.b16 %v947
    %v1014 = vunpack.c.l.b16 %v948
    %v1015 = vunpack.c.l.b16 %v949
    %v1016 = vunpack.c.l.b16 %v950
    %v1017 = vunpack.c.l.b16 %v951
    %v1018 = vunpack.c.l.b16 %v952
    %v1019 = vunpack.c.l.b16 %v953
    %v1020 = vunpack.c.l.b16 %v954
    %v1021 = vpack.c.b16 %v998, %v997
    %v1022 = vpack.c.b16 %v1000, %v999
    %v1023 = vpack.c.b16 %v1002, %v1001
    %v1024 = vpack.c.b16 %v1004, %v1003
    %v1025 = vpack.c.b16 %v1006, %v1005
    %v1026 = vpack.c.b16 %v1008, %v1007
    %v1027 = vpack.c.b16 %v1010, %v1009
    %v1028 = vpack.c.b16 %v1012, %v1011
    %v1029 = vpack.c.b16 %v1014, %v1013
    %v1030 = vpack.c.b16 %v1016, %v1015
    %v1031 = vpack.c.b16 %v1018, %v1017
    %v1032 = vpack.c.b16 %v1020, %v1019
    %v1046 = vsel %vm72, %v968, 0
    %v1049 = vsel %vm72, %v970, 0
    %1051 = vmatpush.bf16.msra.mxu0 %v1028
    %1052 = vmatpush.bf16.msra.mxu0 %v1027
    %1053 = vmatpush.bf16.msra.mxu0 %v1026
    %1054 = vmatpush.bf16.msra.mxu0 %v1025
    %1055 = vmatpush.bf16.msra.mxu0 %v1024
    %1056 = vmatpush.bf16.msra.mxu0 %v1023
    %1057 = vmatpush.bf16.msra.mxu0 %v1022
    %1058 = vmatpush.bf16.msra.mxu0 %v1021
    %1059 = vmatmul.bf16.gmra.mxu0 %v967
    %v1060 = vpop.f32.mrf.mxu0
    %v1061 = vadd.f32 0.0, %v1060
    %v1062 = vpop.f32.mrf.mxu0
    %v1063 = vadd.f32 0.0, %v1062
    %1064 = vmatmul.bf16.gmra.mxu0 %v969
    %v1065 = vpop.f32.mrf.mxu0
    %v1066 = vadd.f32 0.0, %v1065
    %v1067 = vpop.f32.mrf.mxu0
    %v1068 = vadd.f32 0.0, %v1067
    %1069 = vdwg.mxu0
    %1070 = vmatpush.bf16.msra.mxu0 0
    %1071 = vmatpush.bf16.msra.mxu0 0
    %1072 = vmatpush.bf16.msra.mxu0 0
    %1073 = vmatpush.bf16.msra.mxu0 0
    %1074 = vmatpush.bf16.msra.mxu0 %v1032
    %1075 = vmatpush.bf16.msra.mxu0 %v1031
    %1076 = vmatpush.bf16.msra.mxu0 %v1030
    %1077 = vmatpush.bf16.msra.mxu0 %v1029
    %1078 = vmatmul.bf16.gmra.mxu0 %v1046
    %v1079 = vpop.f32.mrf.mxu0
    %v1080 = vadd.f32 %v1061, %v1079
    %v1081 = vpop.f32.mrf.mxu0
    %v1082 = vadd.f32 %v1063, %v1081
    %1083 = vmatmul.bf16.gmra.mxu0 %v1049
    %v1084 = vpop.f32.mrf.mxu0
    %v1085 = vadd.f32 %v1066, %v1084
    %v1086 = vpop.f32.mrf.mxu0
    %v1087 = vadd.f32 %v1068, %v1086
    %1088 = vdwg.mxu0
    %v1089 = vsel %vm72, %v1080, 0.0
    %v1090 = vsel %vm72, %v1082, 0.0
    %v1091 = vadd.f32 %v1089, %v1090
    %v1092 = vsel %vm72, %v1085, 0.0
    %v1093 = vadd.f32 %v1091, %v1092
    %v1094 = vsel %vm72, %v1087, 0.0
    %v1095 = vadd.f32 %v1093, %v1094
    %v1096 = vrot.slane %v1095, 4
    %v1097 = vadd.f32 %v1095, %v1096
    %v1098 = vrot.slane %v1097, 2
    %v1099 = vadd.f32 %v1097, %v1098
    %v1100 = vrot.slane %v1099, 1
    %v1101 = vadd.f32 %v1099, %v1100
    %v1102 = vmul.f32 %v1101, 0.03125
    %v1103 = vsub.f32 %v1080, %v1102
    %v1104 = vsub.f32 %v1082, %v1102
    %v1105 = vsub.f32 %v1085, %v1102
    %v1106 = vsub.f32 %v1087, %v1102
    %v1107 = vmul.f32 %v1103, %v1103
    %v1108 = vmul.f32 %v1104, %v1104
    %v1109 = vmul.f32 %v1105, %v1105
    %v1110 = vmul.f32 %v1106, %v1106
    %v1111 = vsel %vm72, %v1107, 0.0
    %v1112 = vsel %vm72, %v1108, 0.0
    %v1113 = vadd.f32 %v1111, %v1112
    %v1114 = vsel %vm72, %v1109, 0.0
    %v1115 = vadd.f32 %v1113, %v1114
    %v1116 = vsel %vm72, %v1110, 0.0
    %v1117 = vadd.f32 %v1115, %v1116
    %v1118 = vrot.slane %v1117, 4
    %v1119 = vadd.f32 %v1117, %v1118
    %v1120 = vrot.slane %v1119, 2
    %v1121 = vadd.f32 %v1119, %v1120
    %v1122 = vrot.slane %v1121, 1
    %v1123 = vadd.f32 %v1121, %v1122
    %v1124 = vmul.f32 %v1123, 0.03125
    %v1125 = vadd.f32 %v1124, 1e-05
    %v1126 = vrsqrt.pop %v1125
    %v1127 = vmul.f32 %v1126, %v1125
    %v1128 = vmul.f32 %v1127, %v1126
    %v1129 = vmul.f32 0.5, %v1128
    %v1130 = vsub.f32 1.5, %v1129
    %v1131 = vmul.f32 %v1126, %v1130
    %vm1132 = vweird.f32 %v1125
    %vm1133 = vweird.f32 %v1126
    %vm1134 = vmor %vm1132, %vm1133
    %v1135 = vsel %vm1134, %v1126, %v1131
    %v1136 = vmul.f32 %v1135, %v25
    %v1137 = vperm.slane %v1136, 0
    %v1138 = vmul.f32 %v1103, %v1137
    %v1139 = vmul.f32 %v1104, %v1137
    %v1140 = vmul.f32 %v1105, %v1137
    %v1141 = vmul.f32 %v1106, %v1137
    %v1142 = vperm.slane %v25, 0
    %1144 = vrot.lane.b32.xlu0 %v1142, 64
    %v1145 = vpop.permute.xlu0 %1144
    %v1147 = vadd.f32 %v1138, %v1145
    %v1148 = vadd.f32 %v1139, %v1145
    %v1149 = vadd.f32 %v1140, %v1145
    %v1150 = vadd.f32 %v1141, %v1145
    %v1151 = vld [vmem:[#allocation2] sm:$0xff]
    %v1152 = vld [vmem:[#allocation2 + $0x8] sm:$0xff]
    %v1153 = vld [vmem:[#allocation2 + $0x10] sm:$0xff]
    %v1154 = vld [vmem:[#allocation2 + $0x18] sm:$0xff]
    %v1155 = vadd.f32 %v1147, %v1151
    %v1156 = vadd.f32 %v1148, %v1152
    %v1157 = vadd.f32 %v1149, %v1153
    %v1158 = vadd.f32 %v1150, %v1154
    %v1159 = vmax.f32 %v1155, 0.0
    %v1160 = vmax.f32 %v1156, 0.0
    %v1161 = vmax.f32 %v1157, 0.0
    %v1162 = vmax.f32 %v1158, 0.0
    %1163 = vst.msk [vmem:[#allocation5] sm:$0xff] %vm72, %v1159
    %1164 = vst.msk [vmem:[#allocation5 + $0x8] sm:$0xff] %vm72, %v1160
    %1165 = vst.msk [vmem:[#allocation5 + $0x10] sm:$0xff] %vm72, %v1161
    %1166 = vst.msk [vmem:[#allocation5 + $0x18] sm:$0xff] %vm72, %v1162
    // Predicated region
    $region22: #{tpu_custom_call.1} parent=1 // pred_check
      _
    $region23: #{tpu_custom_call.1} parent=1 // pred_check_branch
      %1168 = sbr.rel (0) target = $region25
    $region24: #{tpu_custom_call.1} parent=1 // pred_region
      %1170 = vsyncadd [#allocation6], 0
      %s1171 = sshll.u32 [#allocation5], 4
      %s1172 = int_to_ptr.vmem [resolvable:$true] %s1171
      %s1173 = sshll.u32 %s5, 4
      %s1174 = int_to_ptr.hbm [resolvable:$true] %s1173
      %1179 = dma.vmem_to_hbm [thread:$0]  %s1172, 512, %s1174, [#allocation6], 128, 128, 8
    $region25: #{tpu_custom_call.1} parent=1 // pred_fallthru
      _
    // Predicated region
    $region26: #{tpu_custom_call.1} parent=1 // pred_check
      _
    $region27: #{tpu_custom_call.1} parent=1 // pred_check_branch
      %1181 = sbr.rel (0) target = $region29
    $region28: #{tpu_custom_call.1} parent=1 // pred_region
      %1183 = dma.done [#allocation6], 512
    $region29: #{tpu_custom_call.1} parent=1 // pred_fallthru
      _
    %1184 = vsyncpa [#allocation6], 1

</llo_original>
